<compile_context>
chip_gen: v7x
topology: tpu7x:2x2x1
jax: 0.10.0
libtpu: 0.0.40
codegen_flags: <defaults>
</compile_context>

<pallas_src>
import functools
import math

import jax
import jax.numpy as jnp
from jax import lax
from jax.experimental import pallas as pl
from jax.experimental.pallas import tpu as pltpu

EPS = 1e-5   # nn.LayerNorm default eps
LANE = 128


def _round_up(n, m):
    return ((n + m - 1) // m) * m


def _layernorm_padded(x, gamma, beta, n_real):
    """LayerNorm over the first n_real columns of a zero-padded [R, Ep] f32 tensor.

    Padded columns of x are exactly zero, so sum(x) and sum(x*x) over the full
    lane-padded width equal the sums over the real columns; gamma/beta are
    zero-padded so padded output columns stay exactly zero.
    """
    inv_n = jnp.float32(1.0 / n_real)
    mu = jnp.sum(x, axis=-1, keepdims=True) * inv_n
    ms = jnp.sum(x * x, axis=-1, keepdims=True) * inv_n
    var = ms - mu * mu
    return (x - mu) * lax.rsqrt(var + EPS) * gamma + beta


def fused_forward_kernel(x0_ref, wqkv_ref, wo_ref, w1_ref, w2_ref,
                         vec_e_ref, vec_h_ref, fin_e_ref, wout_ref, bout_ref,
                         o_ref, *, e_real, e_pad, shard_b, seq_len, num_layers):
    """Grid = (batch_shards,) ["parallel"].  One step = full forward for one shard.

    All layers' weights (stacked along a leading L dim, lane-padded) are
    VMEM-resident; the layer loop is fully unrolled at trace time, so the
    residual stream never leaves registers/VMEM.
    """
    Ep = e_pad
    Bs = shard_b
    T = seq_len
    R = Bs * T

    x = x0_ref[...].reshape(R, Ep)          # f32, padded lanes are exactly zero

    for l in range(num_layers):             # static L -> straight-line code
        x_bf = x.astype(jnp.bfloat16)
        vec_e = vec_e_ref[l]                # [8, Ep] f32
        bo, g1, be1 = vec_e[0], vec_e[1], vec_e[2]
        bb2, g2, be2 = vec_e[3], vec_e[4], vec_e[5]
        bb1 = vec_h_ref[l][0]               # [Hp] f32

        # ---- self-attention (single head over full E, as in the module) ----
        # Fused QKV projection; 1/sqrt(E) is folded into the q columns at pack time.
        qkv = jnp.dot(x_bf, wqkv_ref[l],
                      preferred_element_type=jnp.float32)          # [R, 3Ep]
        q = qkv[:, 0 * Ep:1 * Ep].astype(jnp.bfloat16)   # tile-aligned slices
        k = qkv[:, 1 * Ep:2 * Ep].astype(jnp.bfloat16)
        v = qkv[:, 2 * Ep:3 * Ep].astype(jnp.bfloat16)

        if Bs == 1:
            # Degenerate batch: plain 2-D NT dots (no batched-dot reshapes).
            energy = jnp.einsum("qe,ke->qk", q, k,
                                preferred_element_type=jnp.float32)     # [T, T]
            energy = energy - jnp.max(energy, axis=-1, keepdims=True)
            p = jnp.exp(energy)
            attn = p * pl.reciprocal(jnp.sum(p, axis=-1, keepdims=True),
                                     approx=True)
            ctx = jnp.dot(attn.astype(jnp.bfloat16), v,
                          preferred_element_type=jnp.float32)           # [T, Ep]
        else:
            qb = q.reshape(Bs, T, Ep)
            kb = k.reshape(Bs, T, Ep)
            vb = v.reshape(Bs, T, Ep)
            energy = jnp.einsum("bqe,bke->bqk", qb, kb,
                                preferred_element_type=jnp.float32)     # [Bs,T,T]
            energy = energy - jnp.max(energy, axis=-1, keepdims=True)
            p = jnp.exp(energy)
            attn = p * pl.reciprocal(jnp.sum(p, axis=-1, keepdims=True),
                                     approx=True)
            ctx = jnp.einsum("bqk,bke->bqe", attn.astype(jnp.bfloat16), vb,
                             preferred_element_type=jnp.float32).reshape(R, Ep)

        attn_out = jnp.dot(ctx.astype(jnp.bfloat16), wo_ref[l],
                           preferred_element_type=jnp.float32) + bo
        # TODO(synk): dropout is identity here (eval-mode).
        x1 = _layernorm_padded(x + attn_out, g1, be1, e_real)

        # ---- feed-forward: Linear(E,4E) -> ReLU -> Linear(4E,E) ----
        h = jnp.dot(x1.astype(jnp.bfloat16), w1_ref[l],
                    preferred_element_type=jnp.float32) + bb1
        h = jnp.maximum(h, 0.0)
        ff = jnp.dot(h.astype(jnp.bfloat16), w2_ref[l],
                     preferred_element_type=jnp.float32) + bb2
        x = _layernorm_padded(x1 + ff, g2, be2, e_real)

    # ---- final LayerNorm + lane-dense (padded) vocab projection ----
    gf = fin_e_ref[0]
    bf = fin_e_ref[1]
    bout = bout_ref[0]
    xn = _layernorm_padded(x, gf, bf, e_real)
    logits = jnp.dot(xn.astype(jnp.bfloat16), wout_ref[...],
                     preferred_element_type=jnp.float32) + bout
    o_ref[...] = logits.reshape(o_ref.shape)


def _num_batch_shards(batch):
    """2-way batch sharding only on v7x (2 TensorCores/chip); 1 on v5e/v6e."""
    if batch < 2 or batch % 2 != 0:
        return 1
    try:
        kind = str(jax.devices()[0].device_kind).lower()
    except Exception:
        kind = ""
    return 2 if "v7" in kind else 1


def transformer_lm_forward(tokens, params):
    B, T = tokens.shape
    E = params["embed_size"]
    L, Ep, _ = params["wqkv"].shape
    Hp = params["w1"].shape[2]
    Vpad = params["wout_p"].shape[1]
    V = params["vocab_size"]

    num_shards = _num_batch_shards(B)
    Bs = B // num_shards

    # Embedding gather + positional add stays in plain JAX (glue); pad lanes to Ep.
    tok_emb = params["tok_table"][tokens]            # [B, T, E]
    pos_emb = params["pos_table"][:T][None, :, :]    # [1, T, E]
    x0 = (tok_emb + pos_emb).astype(jnp.float32)
    x0 = jnp.pad(x0, ((0, 0), (0, 0), (0, Ep - E)))  # padded lanes stay zero

    kernel = functools.partial(fused_forward_kernel, e_real=E, e_pad=Ep,
                               shard_b=Bs, seq_len=T, num_layers=L)

    in_specs = [
        pl.BlockSpec((Bs, T, Ep), lambda s: (s, 0, 0)),          # x0 (embeddings)
        pl.BlockSpec((L, Ep, 3 * Ep), lambda s: (0, 0, 0)),      # fused wqkv (all layers)
        pl.BlockSpec((L, Ep, Ep), lambda s: (0, 0, 0)),          # wo
        pl.BlockSpec((L, Ep, Hp), lambda s: (0, 0, 0)),          # w1
        pl.BlockSpec((L, Hp, Ep), lambda s: (0, 0, 0)),          # w2
        pl.BlockSpec((L, 8, Ep), lambda s: (0, 0, 0)),           # packed E-width vectors
        pl.BlockSpec((L, 1, Hp), lambda s: (0, 0, 0)),           # bb1 (hidden-width)
        pl.BlockSpec((8, Ep), lambda s: (0, 0)),                 # gf / bf
        pl.BlockSpec((Ep, Vpad), lambda s: (0, 0)),              # padded wout
        pl.BlockSpec((1, Vpad), lambda s: (0, 0)),               # padded bout
    ]
    out_specs = pl.BlockSpec((Bs, T, Vpad), lambda s: (s, 0, 0))

    logits_pad = pl.pallas_call(
        kernel,
        out_shape=jax.ShapeDtypeStruct((B, T, Vpad), jnp.float32),
        grid=(num_shards,),
        in_specs=in_specs,
        out_specs=out_specs,
        compiler_params=pltpu.CompilerParams(
            dimension_semantics=("parallel",)),
    )(x0, params["wqkv"], params["wo"], params["w1"], params["w2"],
      params["vec_e"], params["vec_h"], params["fin_e"],
      params["wout_p"], params["bout_p"])

    # Padded vocab lanes are exactly zero (zero-padded wout/bout); slice them off.
    return logits_pad[:, :, :V]


# ---------------- pure-JAX reference (f32, matches the PyTorch module) -------
def _ref_layernorm(x, g, b):
    mu = jnp.mean(x, axis=-1, keepdims=True)
    var = jnp.mean((x - mu) ** 2, axis=-1, keepdims=True)
    return (x - mu) / jnp.sqrt(var + EPS) * g + b


def reference_forward(tokens, params):
    B, T = tokens.shape
    x = params["tok_table"][tokens] + params["pos_table"][:T][None]
    x = x.astype(jnp.float32)
    E = x.shape[-1]
    for p in params["layers_raw"]:
        q = x @ p["wq"]
        k = x @ p["wk"]
        v = x @ p["wv"]
        energy = jnp.einsum("nqe,nke->nqk", q, k) / math.sqrt(E)
        attn = jax.nn.softmax(energy, axis=2)
        out = jnp.einsum("nqk,nke->nqe", attn, v)
        attn_out = out @ p["wo"] + p["bo"]
        x = _ref_layernorm(x + attn_out, p["g1"], p["be1"])
        h = jax.nn.relu(x @ p["w1"] + p["bb1"])
        ff = h @ p["w2"] + p["bb2"]
        x = _ref_layernorm(x + ff, p["g2"], p["be2"])
    x = _ref_layernorm(x, params["gf"], params["bf"])
    return x @ params["wout"] + params["bout"]


# ---------------------------- parameter init ---------------------------------
def init_params(key, vocab_size, embed_size, num_layers, block_size):
    E = embed_size
    H = 4 * E
    Ep = _round_up(E, LANE)
    Hp = _round_up(H, LANE)
    Vpad = _round_up(vocab_size, LANE)
    keys = jax.random.split(key, 6 + num_layers)

    def w(k, shape, scale=0.02):
        return scale * jax.random.normal(k, shape, dtype=jnp.float32)

    tok_table = w(keys[0], (vocab_size, E))
    pos_table = w(keys[1], (block_size, E))
    wout = w(keys[2], (E, vocab_size))
    bout = w(keys[3], (vocab_size,))
    gf = 1.0 + 0.1 * jax.random.normal(keys[4], (E,), dtype=jnp.float32)
    bf = w(keys[5], (E,), 0.1)

    layers_raw = []
    for li in range(num_layers):
        lk = jax.random.split(keys[6 + li], 13)
        layers_raw.append(dict(
            wq=w(lk[0], (E, E)), wk=w(lk[1], (E, E)), wv=w(lk[2], (E, E)),
            wo=w(lk[3], (E, E)), bo=w(lk[4], (E,)),
            g1=1.0 + 0.1 * jax.random.normal(lk[5], (E,), dtype=jnp.float32),
            be1=w(lk[6], (E,), 0.1),
            w1=w(lk[7], (E, H)), bb1=w(lk[8], (H,)),
            w2=w(lk[9], (H, E)), bb2=w(lk[10], (E,)),
            g2=1.0 + 0.1 * jax.random.normal(lk[11], (E,), dtype=jnp.float32),
            be2=w(lk[12], (E,), 0.1),
        ))

    # ---- kernel-side lane-padded / packed / stacked parameters ----
    def pad_mat(m, rows, cols):
        return jnp.zeros((rows, cols), jnp.float32).at[:m.shape[0], :m.shape[1]].set(m)

    def pad_vec(v, n):
        return jnp.zeros((n,), jnp.float32).at[:v.shape[0]].set(v)

    qscale = 1.0 / math.sqrt(E)     # folded into the q columns of wqkv

    wqkv = jnp.stack([
        jnp.concatenate([pad_mat(p["wq"] * qscale, Ep, Ep),
                         pad_mat(p["wk"], Ep, Ep),
                         pad_mat(p["wv"], Ep, Ep)], axis=1)
        for p in layers_raw]).astype(jnp.bfloat16)                      # [L, Ep, 3Ep]
    wo_s = jnp.stack([pad_mat(p["wo"], Ep, Ep)
                      for p in layers_raw]).astype(jnp.bfloat16)        # [L, Ep, Ep]
    w1_s = jnp.stack([pad_mat(p["w1"], Ep, Hp)
                      for p in layers_raw]).astype(jnp.bfloat16)        # [L, Ep, Hp]
    w2_s = jnp.stack([pad_mat(p["w2"], Hp, Ep)
                      for p in layers_raw]).astype(jnp.bfloat16)        # [L, Hp, Ep]

    zero_e = jnp.zeros((Ep,), jnp.float32)
    vec_e = jnp.stack([
        jnp.stack([pad_vec(p["bo"], Ep), pad_vec(p["g1"], Ep), pad_vec(p["be1"], Ep),
                   pad_vec(p["bb2"], Ep), pad_vec(p["g2"], Ep), pad_vec(p["be2"], Ep),
                   zero_e, zero_e])
        for p in layers_raw])                                           # [L, 8, Ep]
    vec_h = jnp.stack([pad_vec(p["bb1"], Hp)[None, :]
                       for p in layers_raw])                            # [L, 1, Hp]

    fin_e = jnp.zeros((8, Ep), jnp.float32).at[0, :E].set(gf).at[1, :E].set(bf)
    wout_p = pad_mat(wout, Ep, Vpad).astype(jnp.bfloat16)               # [Ep, Vpad]
    bout_p = pad_vec(bout, Vpad)[None, :]                               # [1, Vpad]

    return dict(
        # raw params (reference)
        tok_table=tok_table, pos_table=pos_table, gf=gf, bf=bf,
        wout=wout, bout=bout, layers_raw=layers_raw,
        # packed / padded params (kernel)
        wqkv=wqkv, wo=wo_s, w1=w1_s, w2=w2_s,
        vec_e=vec_e, vec_h=vec_h, fin_e=fin_e,
        wout_p=wout_p, bout_p=bout_p,
        vocab_size=vocab_size, embed_size=E,
    )


if __name__ == "__main__":
    # Small shapes consistent with the module: B=2, T=8 (<= block_size=64),
    # embed=32, vocab=16, 2 layers. (heads is unused by the module's math.)
    B, T = 2, 8
    vocab_size, embed_size, num_layers, block_size = 16, 32, 2, 64

    key = jax.random.PRNGKey(0)
    k_tok, k_par = jax.random.split(key)
    tokens = jax.random.randint(k_tok, (B, T), 0, vocab_size, dtype=jnp.int32)
    params = init_params(k_par, vocab_size, embed_size, num_layers, block_size)

    logits = transformer_lm_forward(tokens, params)
    logits = jax.block_until_ready(logits)

    ref = reference_forward(tokens, params)
    assert logits.shape == (B, T, vocab_size)
    max_diff = float(jnp.max(jnp.abs(logits - ref)))
    # bf16 matmuls + approx reciprocal vs f32 reference -> modest tolerance.
    assert jnp.allclose(logits, ref, atol=1e-2, rtol=1e-2), (
        f"max abs diff = {max_diff}")

    print("KERNEL_OK")
</pallas_src>

<mosaic_0001>
module attributes {stable_mosaic.version = 11 : i64} {
  func.func @fused_forward_kernel(%arg0: i32, %arg1: memref<2x8x128xf32, #tpu.memory_space<vmem>>, %arg2: memref<2x128x384xbf16, #tpu.memory_space<vmem>>, %arg3: memref<2x128x128xbf16, #tpu.memory_space<vmem>>, %arg4: memref<2x128x128xbf16, #tpu.memory_space<vmem>>, %arg5: memref<2x128x128xbf16, #tpu.memory_space<vmem>>, %arg6: memref<2x8x128xf32, #tpu.memory_space<vmem>>, %arg7: memref<2x1x128xf32, #tpu.memory_space<vmem>>, %arg8: memref<8x128xf32, #tpu.memory_space<vmem>>, %arg9: memref<128x128xbf16, #tpu.memory_space<vmem>>, %arg10: memref<1x128xf32, #tpu.memory_space<vmem>>, %arg11: memref<2x8x128xf32, #tpu.memory_space<vmem>>) attributes {dimension_semantics = [#tpu.dimension_semantics<parallel>], iteration_bounds = array<i64: 1>, scalar_prefetch = 0 : i64, scratch_operands = 0 : i64, tpu.core_type = #tpu.core_type<tc>, window_params = [{transform_indices = @transform_0, window_bounds = array<i64: 2, 8, 128>}, {pipeline_mode = #tpu.pipeline_mode<synchronous>, transform_indices = @transform_1, window_bounds = array<i64: 2, 128, 384>}, {pipeline_mode = #tpu.pipeline_mode<synchronous>, transform_indices = @transform_2, window_bounds = array<i64: 2, 128, 128>}, {pipeline_mode = #tpu.pipeline_mode<synchronous>, transform_indices = @transform_3, window_bounds = array<i64: 2, 128, 128>}, {pipeline_mode = #tpu.pipeline_mode<synchronous>, transform_indices = @transform_4, window_bounds = array<i64: 2, 128, 128>}, {pipeline_mode = #tpu.pipeline_mode<synchronous>, transform_indices = @transform_5, window_bounds = array<i64: 2, 8, 128>}, {pipeline_mode = #tpu.pipeline_mode<synchronous>, transform_indices = @transform_6, window_bounds = array<i64: 2, 1, 128>}, {pipeline_mode = #tpu.pipeline_mode<synchronous>, transform_indices = @transform_7, window_bounds = array<i64: 8, 128>}, {pipeline_mode = #tpu.pipeline_mode<synchronous>, transform_indices = @transform_8, window_bounds = array<i64: 128, 128>}, {pipeline_mode = #tpu.pipeline_mode<synchronous>, transform_indices = @transform_9, window_bounds = array<i64: 1, 128>}, {transform_indices = @transform_10, window_bounds = array<i64: 2, 8, 128>}]} {
    %c0 = arith.constant 0 : index
    %c0_0 = arith.constant 0 : index
    %c0_1 = arith.constant 0 : index
    %0 = vector.load %arg1[%c0, %c0_0, %c0_1] : memref<2x8x128xf32, #tpu.memory_space<vmem>>, vector<2x8x128xf32>
    %1 = vector.shape_cast %0 : vector<2x8x128xf32> to vector<16x128xf32>
    %2 = arith.truncf %1 : vector<16x128xf32> to vector<16x128xbf16>
    %c0_2 = arith.constant 0 : index
    %c0_3 = arith.constant 0 : index
    %c0_4 = arith.constant 0 : index
    %3 = vector.load %arg6[%c0_2, %c0_3, %c0_4] : memref<2x8x128xf32, #tpu.memory_space<vmem>>, vector<1x8x128xf32>
    %4 = vector.shape_cast %3 : vector<1x8x128xf32> to vector<8x128xf32>
    %5 = vector.extract_strided_slice %4 {offsets = [0, 0], sizes = [1, 128], strides = [1, 1]} : vector<8x128xf32> to vector<1x128xf32>
    %6 = vector.shape_cast %5 : vector<1x128xf32> to vector<128xf32>
    %7 = vector.extract_strided_slice %4 {offsets = [1, 0], sizes = [1, 128], strides = [1, 1]} : vector<8x128xf32> to vector<1x128xf32>
    %8 = vector.shape_cast %7 : vector<1x128xf32> to vector<128xf32>
    %9 = vector.extract_strided_slice %4 {offsets = [2, 0], sizes = [1, 128], strides = [1, 1]} : vector<8x128xf32> to vector<1x128xf32>
    %10 = vector.shape_cast %9 : vector<1x128xf32> to vector<128xf32>
    %11 = vector.extract_strided_slice %4 {offsets = [3, 0], sizes = [1, 128], strides = [1, 1]} : vector<8x128xf32> to vector<1x128xf32>
    %12 = vector.shape_cast %11 : vector<1x128xf32> to vector<128xf32>
    %13 = vector.extract_strided_slice %4 {offsets = [4, 0], sizes = [1, 128], strides = [1, 1]} : vector<8x128xf32> to vector<1x128xf32>
    %14 = vector.shape_cast %13 : vector<1x128xf32> to vector<128xf32>
    %15 = vector.extract_strided_slice %4 {offsets = [5, 0], sizes = [1, 128], strides = [1, 1]} : vector<8x128xf32> to vector<1x128xf32>
    %16 = vector.shape_cast %15 : vector<1x128xf32> to vector<128xf32>
    %c0_5 = arith.constant 0 : index
    %c0_6 = arith.constant 0 : index
    %c0_7 = arith.constant 0 : index
    %17 = vector.load %arg7[%c0_5, %c0_6, %c0_7] : memref<2x1x128xf32, #tpu.memory_space<vmem>>, vector<1x1x128xf32>
    %18 = vector.shape_cast %17 : vector<1x1x128xf32> to vector<1x128xf32>
    %19 = vector.shape_cast %18 : vector<1x128xf32> to vector<128xf32>
    %c0_8 = arith.constant 0 : index
    %c0_9 = arith.constant 0 : index
    %c0_10 = arith.constant 0 : index
    %20 = vector.load %arg2[%c0_8, %c0_9, %c0_10] : memref<2x128x384xbf16, #tpu.memory_space<vmem>>, vector<1x128x384xbf16>
    %21 = vector.shape_cast %20 : vector<1x128x384xbf16> to vector<128x384xbf16>
    %cst = arith.constant dense<0.000000e+00> : vector<16x384xf32>
    %22 = tpu.matmul %2, %21, %cst {dimension_numbers = #tpu.dot_dimension_numbers<[1], [0], [0], [1], [0, 0, 1, 1], [], []>} : vector<16x128xbf16>, vector<128x384xbf16>, vector<16x384xf32> -> vector<16x384xf32>
    %23 = vector.extract_strided_slice %22 {offsets = [0, 0], sizes = [16, 128], strides = [1, 1]} : vector<16x384xf32> to vector<16x128xf32>
    %24 = arith.truncf %23 : vector<16x128xf32> to vector<16x128xbf16>
    %25 = vector.extract_strided_slice %22 {offsets = [0, 128], sizes = [16, 128], strides = [1, 1]} : vector<16x384xf32> to vector<16x128xf32>
    %26 = arith.truncf %25 : vector<16x128xf32> to vector<16x128xbf16>
    %27 = vector.extract_strided_slice %22 {offsets = [0, 256], sizes = [16, 128], strides = [1, 1]} : vector<16x384xf32> to vector<16x128xf32>
    %28 = arith.truncf %27 : vector<16x128xf32> to vector<16x128xbf16>
    %29 = vector.shape_cast %24 : vector<16x128xbf16> to vector<2x8x128xbf16>
    %30 = vector.shape_cast %26 : vector<16x128xbf16> to vector<2x8x128xbf16>
    %31 = vector.shape_cast %28 : vector<16x128xbf16> to vector<2x8x128xbf16>
    "tpu.trace_start"() <{level = 10 : i32, message = "bqe,bke->bqk"}> : () -> ()
    %cst_11 = arith.constant dense<0.000000e+00> : vector<2x8x8xf32>
    %32 = tpu.matmul %29, %30, %cst_11 {dimension_numbers = #tpu.dot_dimension_numbers<[2], [2], [1], [1], [0, 0, 0, 1, 1, 1], [0], [0]>} : vector<2x8x128xbf16>, vector<2x8x128xbf16>, vector<2x8x8xf32> -> vector<2x8x8xf32>
    "tpu.trace_stop"() : () -> ()
    %cst_12 = arith.constant dense<0xFF800000> : vector<2x8xf32>
    %33 = vector.multi_reduction <maximumf>, %32, %cst_12 [2] : vector<2x8x8xf32> to vector<2x8xf32>
    %34 = vector.shape_cast %33 : vector<2x8xf32> to vector<2x8x1xf32>
    %35 = vector.broadcast %34 : vector<2x8x1xf32> to vector<2x8x8xf32>
    %36 = arith.subf %32, %35 : vector<2x8x8xf32>
    %37 = math.exp %36 : vector<2x8x8xf32>
    %cst_13 = arith.constant dense<0.000000e+00> : vector<2x8xf32>
    %38 = vector.multi_reduction <add>, %37, %cst_13 [2] : vector<2x8x8xf32> to vector<2x8xf32>
    %39 = vector.shape_cast %38 : vector<2x8xf32> to vector<2x8x1xf32>
    %40 = tpu.reciprocal %39 {approx = true} : vector<2x8x1xf32> -> vector<2x8x1xf32>
    %41 = vector.broadcast %40 : vector<2x8x1xf32> to vector<2x8x8xf32>
    %42 = arith.mulf %37, %41 : vector<2x8x8xf32>
    %43 = arith.truncf %42 : vector<2x8x8xf32> to vector<2x8x8xbf16>
    "tpu.trace_start"() <{level = 10 : i32, message = "bqk,bke->bqe"}> : () -> ()
    %cst_14 = arith.constant dense<0.000000e+00> : vector<2x8x128xf32>
    %44 = tpu.matmul %43, %31, %cst_14 {dimension_numbers = #tpu.dot_dimension_numbers<[2], [1], [1], [2], [0, 0, 0, 1, 1, 2], [0], [0]>} : vector<2x8x8xbf16>, vector<2x8x128xbf16>, vector<2x8x128xf32> -> vector<2x8x128xf32>
    "tpu.trace_stop"() : () -> ()
    %45 = vector.shape_cast %44 : vector<2x8x128xf32> to vector<16x128xf32>
    %46 = arith.truncf %45 : vector<16x128xf32> to vector<16x128xbf16>
    %c0_15 = arith.constant 0 : index
    %c0_16 = arith.constant 0 : index
    %c0_17 = arith.constant 0 : index
    %47 = vector.load %arg3[%c0_15, %c0_16, %c0_17] : memref<2x128x128xbf16, #tpu.memory_space<vmem>>, vector<1x128x128xbf16>
    %48 = vector.shape_cast %47 : vector<1x128x128xbf16> to vector<128x128xbf16>
    %cst_18 = arith.constant dense<0.000000e+00> : vector<16x128xf32>
    %49 = tpu.matmul %46, %48, %cst_18 {dimension_numbers = #tpu.dot_dimension_numbers<[1], [0], [0], [1], [0, 0, 1, 1], [], []>} : vector<16x128xbf16>, vector<128x128xbf16>, vector<16x128xf32> -> vector<16x128xf32>
    %50 = vector.shape_cast %6 : vector<128xf32> to vector<1x128xf32>
    %51 = vector.broadcast %50 : vector<1x128xf32> to vector<16x128xf32>
    %52 = arith.addf %49, %51 : vector<16x128xf32>
    %53 = arith.addf %1, %52 : vector<16x128xf32>
    %cst_19 = arith.constant dense<0.000000e+00> : vector<16xf32>
    %54 = vector.multi_reduction <add>, %53, %cst_19 [1] : vector<16x128xf32> to vector<16xf32>
    %55 = vector.shape_cast %54 : vector<16xf32> to vector<16x1xf32>
    %cst_20 = arith.constant 3.125000e-02 : f32
    %56 = vector.broadcast %cst_20 : f32 to vector<16x1xf32>
    %57 = arith.mulf %55, %56 : vector<16x1xf32>
    %58 = arith.mulf %53, %53 : vector<16x128xf32>
    %cst_21 = arith.constant dense<0.000000e+00> : vector<16xf32>
    %59 = vector.multi_reduction <add>, %58, %cst_21 [1] : vector<16x128xf32> to vector<16xf32>
    %60 = vector.shape_cast %59 : vector<16xf32> to vector<16x1xf32>
    %cst_22 = arith.constant 3.125000e-02 : f32
    %61 = vector.broadcast %cst_22 : f32 to vector<16x1xf32>
    %62 = arith.mulf %60, %61 : vector<16x1xf32>
    %63 = arith.mulf %57, %57 : vector<16x1xf32>
    %64 = arith.subf %62, %63 : vector<16x1xf32>
    %65 = vector.broadcast %57 : vector<16x1xf32> to vector<16x128xf32>
    %66 = arith.subf %53, %65 : vector<16x128xf32>
    %cst_23 = arith.constant 9.99999974E-6 : f32
    %67 = vector.broadcast %cst_23 : f32 to vector<16x1xf32>
    %68 = arith.addf %64, %67 : vector<16x1xf32>
    %69 = math.rsqrt %68 : vector<16x1xf32>
    %70 = vector.broadcast %69 : vector<16x1xf32> to vector<16x128xf32>
    %71 = arith.mulf %66, %70 : vector<16x128xf32>
    %72 = vector.shape_cast %8 : vector<128xf32> to vector<1x128xf32>
    %73 = vector.broadcast %72 : vector<1x128xf32> to vector<16x128xf32>
    %74 = arith.mulf %71, %73 : vector<16x128xf32>
    %75 = vector.shape_cast %10 : vector<128xf32> to vector<1x128xf32>
    %76 = vector.broadcast %75 : vector<1x128xf32> to vector<16x128xf32>
    %77 = arith.addf %74, %76 : vector<16x128xf32>
    %78 = arith.truncf %77 : vector<16x128xf32> to vector<16x128xbf16>
    %c0_24 = arith.constant 0 : index
    %c0_25 = arith.constant 0 : index
    %c0_26 = arith.constant 0 : index
    %79 = vector.load %arg4[%c0_24, %c0_25, %c0_26] : memref<2x128x128xbf16, #tpu.memory_space<vmem>>, vector<1x128x128xbf16>
    %80 = vector.shape_cast %79 : vector<1x128x128xbf16> to vector<128x128xbf16>
    %cst_27 = arith.constant dense<0.000000e+00> : vector<16x128xf32>
    %81 = tpu.matmul %78, %80, %cst_27 {dimension_numbers = #tpu.dot_dimension_numbers<[1], [0], [0], [1], [0, 0, 1, 1], [], []>} : vector<16x128xbf16>, vector<128x128xbf16>, vector<16x128xf32> -> vector<16x128xf32>
    %82 = vector.shape_cast %19 : vector<128xf32> to vector<1x128xf32>
    %83 = vector.broadcast %82 : vector<1x128xf32> to vector<16x128xf32>
    %84 = arith.addf %81, %83 : vector<16x128xf32>
    %cst_28 = arith.constant 0.000000e+00 : f32
    %85 = vector.broadcast %cst_28 : f32 to vector<16x128xf32>
    %86 = arith.maximumf %84, %85 : vector<16x128xf32>
    %87 = arith.truncf %86 : vector<16x128xf32> to vector<16x128xbf16>
    %c0_29 = arith.constant 0 : index
    %c0_30 = arith.constant 0 : index
    %c0_31 = arith.constant 0 : index
    %88 = vector.load %arg5[%c0_29, %c0_30, %c0_31] : memref<2x128x128xbf16, #tpu.memory_space<vmem>>, vector<1x128x128xbf16>
    %89 = vector.shape_cast %88 : vector<1x128x128xbf16> to vector<128x128xbf16>
    %cst_32 = arith.constant dense<0.000000e+00> : vector<16x128xf32>
    %90 = tpu.matmul %87, %89, %cst_32 {dimension_numbers = #tpu.dot_dimension_numbers<[1], [0], [0], [1], [0, 0, 1, 1], [], []>} : vector<16x128xbf16>, vector<128x128xbf16>, vector<16x128xf32> -> vector<16x128xf32>
    %91 = vector.shape_cast %12 : vector<128xf32> to vector<1x128xf32>
    %92 = vector.broadcast %91 : vector<1x128xf32> to vector<16x128xf32>
    %93 = arith.addf %90, %92 : vector<16x128xf32>
    %94 = arith.addf %77, %93 : vector<16x128xf32>
    %cst_33 = arith.constant dense<0.000000e+00> : vector<16xf32>
    %95 = vector.multi_reduction <add>, %94, %cst_33 [1] : vector<16x128xf32> to vector<16xf32>
    %96 = vector.shape_cast %95 : vector<16xf32> to vector<16x1xf32>
    %cst_34 = arith.constant 3.125000e-02 : f32
    %97 = vector.broadcast %cst_34 : f32 to vector<16x1xf32>
    %98 = arith.mulf %96, %97 : vector<16x1xf32>
    %99 = arith.mulf %94, %94 : vector<16x128xf32>
    %cst_35 = arith.constant dense<0.000000e+00> : vector<16xf32>
    %100 = vector.multi_reduction <add>, %99, %cst_35 [1] : vector<16x128xf32> to vector<16xf32>
    %101 = vector.shape_cast %100 : vector<16xf32> to vector<16x1xf32>
    %cst_36 = arith.constant 3.125000e-02 : f32
    %102 = vector.broadcast %cst_36 : f32 to vector<16x1xf32>
    %103 = arith.mulf %101, %102 : vector<16x1xf32>
    %104 = arith.mulf %98, %98 : vector<16x1xf32>
    %105 = arith.subf %103, %104 : vector<16x1xf32>
    %106 = vector.broadcast %98 : vector<16x1xf32> to vector<16x128xf32>
    %107 = arith.subf %94, %106 : vector<16x128xf32>
    %cst_37 = arith.constant 9.99999974E-6 : f32
    %108 = vector.broadcast %cst_37 : f32 to vector<16x1xf32>
    %109 = arith.addf %105, %108 : vector<16x1xf32>
    %110 = math.rsqrt %109 : vector<16x1xf32>
    %111 = vector.broadcast %110 : vector<16x1xf32> to vector<16x128xf32>
    %112 = arith.mulf %107, %111 : vector<16x128xf32>
    %113 = vector.shape_cast %14 : vector<128xf32> to vector<1x128xf32>
    %114 = vector.broadcast %113 : vector<1x128xf32> to vector<16x128xf32>
    %115 = arith.mulf %112, %114 : vector<16x128xf32>
    %116 = vector.shape_cast %16 : vector<128xf32> to vector<1x128xf32>
    %117 = vector.broadcast %116 : vector<1x128xf32> to vector<16x128xf32>
    %118 = arith.addf %115, %117 : vector<16x128xf32>
    %119 = arith.truncf %118 : vector<16x128xf32> to vector<16x128xbf16>
    %c1 = arith.constant 1 : index
    %c0_38 = arith.constant 0 : index
    %c0_39 = arith.constant 0 : index
    %120 = vector.load %arg6[%c1, %c0_38, %c0_39] : memref<2x8x128xf32, #tpu.memory_space<vmem>>, vector<1x8x128xf32>
    %121 = vector.shape_cast %120 : vector<1x8x128xf32> to vector<8x128xf32>
    %122 = vector.extract_strided_slice %121 {offsets = [0, 0], sizes = [1, 128], strides = [1, 1]} : vector<8x128xf32> to vector<1x128xf32>
    %123 = vector.shape_cast %122 : vector<1x128xf32> to vector<128xf32>
    %124 = vector.extract_strided_slice %121 {offsets = [1, 0], sizes = [1, 128], strides = [1, 1]} : vector<8x128xf32> to vector<1x128xf32>
    %125 = vector.shape_cast %124 : vector<1x128xf32> to vector<128xf32>
    %126 = vector.extract_strided_slice %121 {offsets = [2, 0], sizes = [1, 128], strides = [1, 1]} : vector<8x128xf32> to vector<1x128xf32>
    %127 = vector.shape_cast %126 : vector<1x128xf32> to vector<128xf32>
    %128 = vector.extract_strided_slice %121 {offsets = [3, 0], sizes = [1, 128], strides = [1, 1]} : vector<8x128xf32> to vector<1x128xf32>
    %129 = vector.shape_cast %128 : vector<1x128xf32> to vector<128xf32>
    %130 = vector.extract_strided_slice %121 {offsets = [4, 0], sizes = [1, 128], strides = [1, 1]} : vector<8x128xf32> to vector<1x128xf32>
    %131 = vector.shape_cast %130 : vector<1x128xf32> to vector<128xf32>
    %132 = vector.extract_strided_slice %121 {offsets = [5, 0], sizes = [1, 128], strides = [1, 1]} : vector<8x128xf32> to vector<1x128xf32>
    %133 = vector.shape_cast %132 : vector<1x128xf32> to vector<128xf32>
    %c1_40 = arith.constant 1 : index
    %c0_41 = arith.constant 0 : index
    %c0_42 = arith.constant 0 : index
    %134 = vector.load %arg7[%c1_40, %c0_41, %c0_42] : memref<2x1x128xf32, #tpu.memory_space<vmem>>, vector<1x1x128xf32>
    %135 = vector.shape_cast %134 : vector<1x1x128xf32> to vector<1x128xf32>
    %136 = vector.shape_cast %135 : vector<1x128xf32> to vector<128xf32>
    %c1_43 = arith.constant 1 : index
    %c0_44 = arith.constant 0 : index
    %c0_45 = arith.constant 0 : index
    %137 = vector.load %arg2[%c1_43, %c0_44, %c0_45] : memref<2x128x384xbf16, #tpu.memory_space<vmem>>, vector<1x128x384xbf16>
    %138 = vector.shape_cast %137 : vector<1x128x384xbf16> to vector<128x384xbf16>
    %cst_46 = arith.constant dense<0.000000e+00> : vector<16x384xf32>
    %139 = tpu.matmul %119, %138, %cst_46 {dimension_numbers = #tpu.dot_dimension_numbers<[1], [0], [0], [1], [0, 0, 1, 1], [], []>} : vector<16x128xbf16>, vector<128x384xbf16>, vector<16x384xf32> -> vector<16x384xf32>
    %140 = vector.extract_strided_slice %139 {offsets = [0, 0], sizes = [16, 128], strides = [1, 1]} : vector<16x384xf32> to vector<16x128xf32>
    %141 = arith.truncf %140 : vector<16x128xf32> to vector<16x128xbf16>
    %142 = vector.extract_strided_slice %139 {offsets = [0, 128], sizes = [16, 128], strides = [1, 1]} : vector<16x384xf32> to vector<16x128xf32>
    %143 = arith.truncf %142 : vector<16x128xf32> to vector<16x128xbf16>
    %144 = vector.extract_strided_slice %139 {offsets = [0, 256], sizes = [16, 128], strides = [1, 1]} : vector<16x384xf32> to vector<16x128xf32>
    %145 = arith.truncf %144 : vector<16x128xf32> to vector<16x128xbf16>
    %146 = vector.shape_cast %141 : vector<16x128xbf16> to vector<2x8x128xbf16>
    %147 = vector.shape_cast %143 : vector<16x128xbf16> to vector<2x8x128xbf16>
    %148 = vector.shape_cast %145 : vector<16x128xbf16> to vector<2x8x128xbf16>
    "tpu.trace_start"() <{level = 10 : i32, message = "bqe,bke->bqk"}> : () -> ()
    %cst_47 = arith.constant dense<0.000000e+00> : vector<2x8x8xf32>
    %149 = tpu.matmul %146, %147, %cst_47 {dimension_numbers = #tpu.dot_dimension_numbers<[2], [2], [1], [1], [0, 0, 0, 1, 1, 1], [0], [0]>} : vector<2x8x128xbf16>, vector<2x8x128xbf16>, vector<2x8x8xf32> -> vector<2x8x8xf32>
    "tpu.trace_stop"() : () -> ()
    %cst_48 = arith.constant dense<0xFF800000> : vector<2x8xf32>
    %150 = vector.multi_reduction <maximumf>, %149, %cst_48 [2] : vector<2x8x8xf32> to vector<2x8xf32>
    %151 = vector.shape_cast %150 : vector<2x8xf32> to vector<2x8x1xf32>
    %152 = vector.broadcast %151 : vector<2x8x1xf32> to vector<2x8x8xf32>
    %153 = arith.subf %149, %152 : vector<2x8x8xf32>
    %154 = math.exp %153 : vector<2x8x8xf32>
    %cst_49 = arith.constant dense<0.000000e+00> : vector<2x8xf32>
    %155 = vector.multi_reduction <add>, %154, %cst_49 [2] : vector<2x8x8xf32> to vector<2x8xf32>
    %156 = vector.shape_cast %155 : vector<2x8xf32> to vector<2x8x1xf32>
    %157 = tpu.reciprocal %156 {approx = true} : vector<2x8x1xf32> -> vector<2x8x1xf32>
    %158 = vector.broadcast %157 : vector<2x8x1xf32> to vector<2x8x8xf32>
    %159 = arith.mulf %154, %158 : vector<2x8x8xf32>
    %160 = arith.truncf %159 : vector<2x8x8xf32> to vector<2x8x8xbf16>
    "tpu.trace_start"() <{level = 10 : i32, message = "bqk,bke->bqe"}> : () -> ()
    %cst_50 = arith.constant dense<0.000000e+00> : vector<2x8x128xf32>
    %161 = tpu.matmul %160, %148, %cst_50 {dimension_numbers = #tpu.dot_dimension_numbers<[2], [1], [1], [2], [0, 0, 0, 1, 1, 2], [0], [0]>} : vector<2x8x8xbf16>, vector<2x8x128xbf16>, vector<2x8x128xf32> -> vector<2x8x128xf32>
    "tpu.trace_stop"() : () -> ()
    %162 = vector.shape_cast %161 : vector<2x8x128xf32> to vector<16x128xf32>
    %163 = arith.truncf %162 : vector<16x128xf32> to vector<16x128xbf16>
    %c1_51 = arith.constant 1 : index
    %c0_52 = arith.constant 0 : index
    %c0_53 = arith.constant 0 : index
    %164 = vector.load %arg3[%c1_51, %c0_52, %c0_53] : memref<2x128x128xbf16, #tpu.memory_space<vmem>>, vector<1x128x128xbf16>
    %165 = vector.shape_cast %164 : vector<1x128x128xbf16> to vector<128x128xbf16>
    %cst_54 = arith.constant dense<0.000000e+00> : vector<16x128xf32>
    %166 = tpu.matmul %163, %165, %cst_54 {dimension_numbers = #tpu.dot_dimension_numbers<[1], [0], [0], [1], [0, 0, 1, 1], [], []>} : vector<16x128xbf16>, vector<128x128xbf16>, vector<16x128xf32> -> vector<16x128xf32>
    %167 = vector.shape_cast %123 : vector<128xf32> to vector<1x128xf32>
    %168 = vector.broadcast %167 : vector<1x128xf32> to vector<16x128xf32>
    %169 = arith.addf %166, %168 : vector<16x128xf32>
    %170 = arith.addf %118, %169 : vector<16x128xf32>
    %cst_55 = arith.constant dense<0.000000e+00> : vector<16xf32>
    %171 = vector.multi_reduction <add>, %170, %cst_55 [1] : vector<16x128xf32> to vector<16xf32>
    %172 = vector.shape_cast %171 : vector<16xf32> to vector<16x1xf32>
    %cst_56 = arith.constant 3.125000e-02 : f32
    %173 = vector.broadcast %cst_56 : f32 to vector<16x1xf32>
    %174 = arith.mulf %172, %173 : vector<16x1xf32>
    %175 = arith.mulf %170, %170 : vector<16x128xf32>
    %cst_57 = arith.constant dense<0.000000e+00> : vector<16xf32>
    %176 = vector.multi_reduction <add>, %175, %cst_57 [1] : vector<16x128xf32> to vector<16xf32>
    %177 = vector.shape_cast %176 : vector<16xf32> to vector<16x1xf32>
    %cst_58 = arith.constant 3.125000e-02 : f32
    %178 = vector.broadcast %cst_58 : f32 to vector<16x1xf32>
    %179 = arith.mulf %177, %178 : vector<16x1xf32>
    %180 = arith.mulf %174, %174 : vector<16x1xf32>
    %181 = arith.subf %179, %180 : vector<16x1xf32>
    %182 = vector.broadcast %174 : vector<16x1xf32> to vector<16x128xf32>
    %183 = arith.subf %170, %182 : vector<16x128xf32>
    %cst_59 = arith.constant 9.99999974E-6 : f32
    %184 = vector.broadcast %cst_59 : f32 to vector<16x1xf32>
    %185 = arith.addf %181, %184 : vector<16x1xf32>
    %186 = math.rsqrt %185 : vector<16x1xf32>
    %187 = vector.broadcast %186 : vector<16x1xf32> to vector<16x128xf32>
    %188 = arith.mulf %183, %187 : vector<16x128xf32>
    %189 = vector.shape_cast %125 : vector<128xf32> to vector<1x128xf32>
    %190 = vector.broadcast %189 : vector<1x128xf32> to vector<16x128xf32>
    %191 = arith.mulf %188, %190 : vector<16x128xf32>
    %192 = vector.shape_cast %127 : vector<128xf32> to vector<1x128xf32>
    %193 = vector.broadcast %192 : vector<1x128xf32> to vector<16x128xf32>
    %194 = arith.addf %191, %193 : vector<16x128xf32>
    %195 = arith.truncf %194 : vector<16x128xf32> to vector<16x128xbf16>
    %c1_60 = arith.constant 1 : index
    %c0_61 = arith.constant 0 : index
    %c0_62 = arith.constant 0 : index
    %196 = vector.load %arg4[%c1_60, %c0_61, %c0_62] : memref<2x128x128xbf16, #tpu.memory_space<vmem>>, vector<1x128x128xbf16>
    %197 = vector.shape_cast %196 : vector<1x128x128xbf16> to vector<128x128xbf16>
    %cst_63 = arith.constant dense<0.000000e+00> : vector<16x128xf32>
    %198 = tpu.matmul %195, %197, %cst_63 {dimension_numbers = #tpu.dot_dimension_numbers<[1], [0], [0], [1], [0, 0, 1, 1], [], []>} : vector<16x128xbf16>, vector<128x128xbf16>, vector<16x128xf32> -> vector<16x128xf32>
    %199 = vector.shape_cast %136 : vector<128xf32> to vector<1x128xf32>
    %200 = vector.broadcast %199 : vector<1x128xf32> to vector<16x128xf32>
    %201 = arith.addf %198, %200 : vector<16x128xf32>
    %cst_64 = arith.constant 0.000000e+00 : f32
    %202 = vector.broadcast %cst_64 : f32 to vector<16x128xf32>
    %203 = arith.maximumf %201, %202 : vector<16x128xf32>
    %204 = arith.truncf %203 : vector<16x128xf32> to vector<16x128xbf16>
    %c1_65 = arith.constant 1 : index
    %c0_66 = arith.constant 0 : index
    %c0_67 = arith.constant 0 : index
    %205 = vector.load %arg5[%c1_65, %c0_66, %c0_67] : memref<2x128x128xbf16, #tpu.memory_space<vmem>>, vector<1x128x128xbf16>
    %206 = vector.shape_cast %205 : vector<1x128x128xbf16> to vector<128x128xbf16>
    %cst_68 = arith.constant dense<0.000000e+00> : vector<16x128xf32>
    %207 = tpu.matmul %204, %206, %cst_68 {dimension_numbers = #tpu.dot_dimension_numbers<[1], [0], [0], [1], [0, 0, 1, 1], [], []>} : vector<16x128xbf16>, vector<128x128xbf16>, vector<16x128xf32> -> vector<16x128xf32>
    %208 = vector.shape_cast %129 : vector<128xf32> to vector<1x128xf32>
    %209 = vector.broadcast %208 : vector<1x128xf32> to vector<16x128xf32>
    %210 = arith.addf %207, %209 : vector<16x128xf32>
    %211 = arith.addf %194, %210 : vector<16x128xf32>
    %cst_69 = arith.constant dense<0.000000e+00> : vector<16xf32>
    %212 = vector.multi_reduction <add>, %211, %cst_69 [1] : vector<16x128xf32> to vector<16xf32>
    %213 = vector.shape_cast %212 : vector<16xf32> to vector<16x1xf32>
    %cst_70 = arith.constant 3.125000e-02 : f32
    %214 = vector.broadcast %cst_70 : f32 to vector<16x1xf32>
    %215 = arith.mulf %213, %214 : vector<16x1xf32>
    %216 = arith.mulf %211, %211 : vector<16x128xf32>
    %cst_71 = arith.constant dense<0.000000e+00> : vector<16xf32>
    %217 = vector.multi_reduction <add>, %216, %cst_71 [1] : vector<16x128xf32> to vector<16xf32>
    %218 = vector.shape_cast %217 : vector<16xf32> to vector<16x1xf32>
    %cst_72 = arith.constant 3.125000e-02 : f32
    %219 = vector.broadcast %cst_72 : f32 to vector<16x1xf32>
    %220 = arith.mulf %218, %219 : vector<16x1xf32>
    %221 = arith.mulf %215, %215 : vector<16x1xf32>
    %222 = arith.subf %220, %221 : vector<16x1xf32>
    %223 = vector.broadcast %215 : vector<16x1xf32> to vector<16x128xf32>
    %224 = arith.subf %211, %223 : vector<16x128xf32>
    %cst_73 = arith.constant 9.99999974E-6 : f32
    %225 = vector.broadcast %cst_73 : f32 to vector<16x1xf32>
    %226 = arith.addf %222, %225 : vector<16x1xf32>
    %227 = math.rsqrt %226 : vector<16x1xf32>
    %228 = vector.broadcast %227 : vector<16x1xf32> to vector<16x128xf32>
    %229 = arith.mulf %224, %228 : vector<16x128xf32>
    %230 = vector.shape_cast %131 : vector<128xf32> to vector<1x128xf32>
    %231 = vector.broadcast %230 : vector<1x128xf32> to vector<16x128xf32>
    %232 = arith.mulf %229, %231 : vector<16x128xf32>
    %233 = vector.shape_cast %133 : vector<128xf32> to vector<1x128xf32>
    %234 = vector.broadcast %233 : vector<1x128xf32> to vector<16x128xf32>
    %235 = arith.addf %232, %234 : vector<16x128xf32>
    %c0_74 = arith.constant 0 : index
    %c0_75 = arith.constant 0 : index
    %236 = vector.load %arg8[%c0_74, %c0_75] : memref<8x128xf32, #tpu.memory_space<vmem>>, vector<1x128xf32>
    %237 = vector.shape_cast %236 : vector<1x128xf32> to vector<128xf32>
    %c1_76 = arith.constant 1 : index
    %c0_77 = arith.constant 0 : index
    %238 = vector.load %arg8[%c1_76, %c0_77] : memref<8x128xf32, #tpu.memory_space<vmem>>, vector<1x128xf32>
    %239 = vector.shape_cast %238 : vector<1x128xf32> to vector<128xf32>
    %c0_78 = arith.constant 0 : index
    %c0_79 = arith.constant 0 : index
    %240 = vector.load %arg10[%c0_78, %c0_79] : memref<1x128xf32, #tpu.memory_space<vmem>>, vector<1x128xf32>
    %241 = vector.shape_cast %240 : vector<1x128xf32> to vector<128xf32>
    %cst_80 = arith.constant dense<0.000000e+00> : vector<16xf32>
    %242 = vector.multi_reduction <add>, %235, %cst_80 [1] : vector<16x128xf32> to vector<16xf32>
    %243 = vector.shape_cast %242 : vector<16xf32> to vector<16x1xf32>
    %cst_81 = arith.constant 3.125000e-02 : f32
    %244 = vector.broadcast %cst_81 : f32 to vector<16x1xf32>
    %245 = arith.mulf %243, %244 : vector<16x1xf32>
    %246 = arith.mulf %235, %235 : vector<16x128xf32>
    %cst_82 = arith.constant dense<0.000000e+00> : vector<16xf32>
    %247 = vector.multi_reduction <add>, %246, %cst_82 [1] : vector<16x128xf32> to vector<16xf32>
    %248 = vector.shape_cast %247 : vector<16xf32> to vector<16x1xf32>
    %cst_83 = arith.constant 3.125000e-02 : f32
    %249 = vector.broadcast %cst_83 : f32 to vector<16x1xf32>
    %250 = arith.mulf %248, %249 : vector<16x1xf32>
    %251 = arith.mulf %245, %245 : vector<16x1xf32>
    %252 = arith.subf %250, %251 : vector<16x1xf32>
    %253 = vector.broadcast %245 : vector<16x1xf32> to vector<16x128xf32>
    %254 = arith.subf %235, %253 : vector<16x128xf32>
    %cst_84 = arith.constant 9.99999974E-6 : f32
    %255 = vector.broadcast %cst_84 : f32 to vector<16x1xf32>
    %256 = arith.addf %252, %255 : vector<16x1xf32>
    %257 = math.rsqrt %256 : vector<16x1xf32>
    %258 = vector.broadcast %257 : vector<16x1xf32> to vector<16x128xf32>
    %259 = arith.mulf %254, %258 : vector<16x128xf32>
    %260 = vector.shape_cast %237 : vector<128xf32> to vector<1x128xf32>
    %261 = vector.broadcast %260 : vector<1x128xf32> to vector<16x128xf32>
    %262 = arith.mulf %259, %261 : vector<16x128xf32>
    %263 = vector.shape_cast %239 : vector<128xf32> to vector<1x128xf32>
    %264 = vector.broadcast %263 : vector<1x128xf32> to vector<16x128xf32>
    %265 = arith.addf %262, %264 : vector<16x128xf32>
    %266 = arith.truncf %265 : vector<16x128xf32> to vector<16x128xbf16>
    %c0_85 = arith.constant 0 : index
    %c0_86 = arith.constant 0 : index
    %267 = vector.load %arg9[%c0_85, %c0_86] : memref<128x128xbf16, #tpu.memory_space<vmem>>, vector<128x128xbf16>
    %cst_87 = arith.constant dense<0.000000e+00> : vector<16x128xf32>
    %268 = tpu.matmul %266, %267, %cst_87 {dimension_numbers = #tpu.dot_dimension_numbers<[1], [0], [0], [1], [0, 0, 1, 1], [], []>} : vector<16x128xbf16>, vector<128x128xbf16>, vector<16x128xf32> -> vector<16x128xf32>
    %269 = vector.shape_cast %241 : vector<128xf32> to vector<1x128xf32>
    %270 = vector.broadcast %269 : vector<1x128xf32> to vector<16x128xf32>
    %271 = arith.addf %268, %270 : vector<16x128xf32>
    %272 = vector.shape_cast %271 : vector<16x128xf32> to vector<2x8x128xf32>
    %c0_88 = arith.constant 0 : index
    %c0_89 = arith.constant 0 : index
    %c0_90 = arith.constant 0 : index
    %273 = vector.load %arg11[%c0_88, %c0_89, %c0_90] : memref<2x8x128xf32, #tpu.memory_space<vmem>>, vector<2x8x128xf32>
    tpu.vector_store %arg11[%c0_88, %c0_89, %c0_90], %272 {strides = array<i32>} : memref<2x8x128xf32, #tpu.memory_space<vmem>>, vector<2x8x128xf32>,
    return
  }
  func.func @transform_0(%arg0: i32) -> (i32, i32, i32) {
    %c0_i32 = arith.constant 0 : i32
    %c0_i32_0 = arith.constant 0 : i32
    %c0_i32_1 = arith.constant 0 : i32
    return %arg0, %c0_i32, %c0_i32_0 : i32, i32, i32
  }
  func.func @transform_1(%arg0: i32) -> (i32, i32, i32) {
    %c0_i32 = arith.constant 0 : i32
    %c0_i32_0 = arith.constant 0 : i32
    %c0_i32_1 = arith.constant 0 : i32
    %c0_i32_2 = arith.constant 0 : i32
    return %c0_i32, %c0_i32_0, %c0_i32_1 : i32, i32, i32
  }
  func.func @transform_2(%arg0: i32) -> (i32, i32, i32) {
    %c0_i32 = arith.constant 0 : i32
    %c0_i32_0 = arith.constant 0 : i32
    %c0_i32_1 = arith.constant 0 : i32
    %c0_i32_2 = arith.constant 0 : i32
    return %c0_i32, %c0_i32_0, %c0_i32_1 : i32, i32, i32
  }
  func.func @transform_3(%arg0: i32) -> (i32, i32, i32) {
    %c0_i32 = arith.constant 0 : i32
    %c0_i32_0 = arith.constant 0 : i32
    %c0_i32_1 = arith.constant 0 : i32
    %c0_i32_2 = arith.constant 0 : i32
    return %c0_i32, %c0_i32_0, %c0_i32_1 : i32, i32, i32
  }
  func.func @transform_4(%arg0: i32) -> (i32, i32, i32) {
    %c0_i32 = arith.constant 0 : i32
    %c0_i32_0 = arith.constant 0 : i32
    %c0_i32_1 = arith.constant 0 : i32
    %c0_i32_2 = arith.constant 0 : i32
    return %c0_i32, %c0_i32_0, %c0_i32_1 : i32, i32, i32
  }
  func.func @transform_5(%arg0: i32) -> (i32, i32, i32) {
    %c0_i32 = arith.constant 0 : i32
    %c0_i32_0 = arith.constant 0 : i32
    %c0_i32_1 = arith.constant 0 : i32
    %c0_i32_2 = arith.constant 0 : i32
    return %c0_i32, %c0_i32_0, %c0_i32_1 : i32, i32, i32
  }
  func.func @transform_6(%arg0: i32) -> (i32, i32, i32) {
    %c0_i32 = arith.constant 0 : i32
    %c0_i32_0 = arith.constant 0 : i32
    %c0_i32_1 = arith.constant 0 : i32
    %c0_i32_2 = arith.constant 0 : i32
    return %c0_i32, %c0_i32_0, %c0_i32_1 : i32, i32, i32
  }
  func.func @transform_7(%arg0: i32) -> (i32, i32) {
    %c0_i32 = arith.constant 0 : i32
    %c0_i32_0 = arith.constant 0 : i32
    %c0_i32_1 = arith.constant 0 : i32
    return %c0_i32, %c0_i32_0 : i32, i32
  }
  func.func @transform_8(%arg0: i32) -> (i32, i32) {
    %c0_i32 = arith.constant 0 : i32
    %c0_i32_0 = arith.constant 0 : i32
    %c0_i32_1 = arith.constant 0 : i32
    return %c0_i32, %c0_i32_0 : i32, i32
  }
  func.func @transform_9(%arg0: i32) -> (i32, i32) {
    %c0_i32 = arith.constant 0 : i32
    %c0_i32_0 = arith.constant 0 : i32
    %c0_i32_1 = arith.constant 0 : i32
    return %c0_i32, %c0_i32_0 : i32, i32
  }
  func.func @transform_10(%arg0: i32) -> (i32, i32, i32) {
    %c0_i32 = arith.constant 0 : i32
    %c0_i32_0 = arith.constant 0 : i32
    %c0_i32_1 = arith.constant 0 : i32
    return %arg0, %c0_i32, %c0_i32_0 : i32, i32, i32
  }
}

</mosaic_0001>

<llo_original>
// kernel: tpu_custom_call.1
$region0: #{tpu_custom_call.1}
  #allocation0 [shape = 'u32[]', space=smem, size = 0x4, offset = 0x4, fixed_abs, tag = 'smem constant byte address 0x4 - core index']
  #allocation1 [shape = 'u32[144,128]{1,0:T(1,128)}', space=vmem, size = 0x12000, scoped, tag = 'internal scratch']
  %s0 = inlined_call_operand.hbm [shape: f32[2,8,128], index: 0, kind: input, shape index: {}]
  %s1 = inlined_call_operand.hbm [shape: bf16[2,128,384], index: 1, kind: input, shape index: {}]
  %s2 = inlined_call_operand.hbm [shape: bf16[2,128,128], index: 2, kind: input, shape index: {}]
  %s3 = inlined_call_operand.hbm [shape: bf16[2,128,128], index: 3, kind: input, shape index: {}]
  %s4 = inlined_call_operand.hbm [shape: bf16[2,128,128], index: 4, kind: input, shape index: {}]
  %s5 = inlined_call_operand.vmem [shape: f32[2,8,128], index: 5, kind: input, shape index: {}]
  %s6 = inlined_call_operand.vmem [shape: f32[2,1,128], index: 6, kind: input, shape index: {}]
  %s7 = inlined_call_operand.vmem [shape: f32[8,128], index: 7, kind: input, shape index: {}]
  %s8 = inlined_call_operand.hbm [shape: bf16[128,128], index: 8, kind: input, shape index: {}]
  %s9 = inlined_call_operand.vmem [shape: f32[1,128], index: 9, kind: input, shape index: {}]
  %s10 = inlined_call_operand.hbm [shape: f32[2,8,128], index: 10, kind: output, shape index: {}]
  %s11 = sld [smem:[#allocation0]]
  $region74: #{tpu_custom_call.1} parent=0
    _
  %s13 = ssub.s32 1, %s11
  %s14 = scalar_select 0, %s13, %s11
  $region1: #{tpu_custom_call.1} parent=0
    #allocation2 [shape = 'u8[8192]{0}', space=vmem, size = 0x2000, scoped, tag = 'input window, operand 0, single buffered']
    #allocation3 [shape = 's32[1]{0}', space=sflag, size = 0x4, scoped, tag = 'scoped memory for tpu_custom_call.1']
    #allocation4 [shape = 's32[1]{0}', space=sflag, size = 0x4, scoped, tag = 'scoped memory for tpu_custom_call.1']
    #allocation5 [shape = 'u8[196608]{0}', space=vmem, size = 0x30000, scoped, tag = 'input window, operand 1, single buffered']
    #allocation6 [shape = 's32[1]{0}', space=sflag, size = 0x4, scoped, tag = 'scoped memory for tpu_custom_call.1']
    #allocation7 [shape = 'u8[65536]{0}', space=vmem, size = 0x10000, scoped, tag = 'input window, operand 2, single buffered']
    #allocation8 [shape = 'u8[65536]{0}', space=vmem, size = 0x10000, scoped, tag = 'input window, operand 3, single buffered']
    #allocation9 [shape = 's32[1]{0}', space=sflag, size = 0x4, scoped, tag = 'scoped memory for tpu_custom_call.1']
    #allocation10 [shape = 'u8[65536]{0}', space=vmem, size = 0x10000, scoped, tag = 'input window, operand 4, single buffered']
    #allocation11 [shape = 'u8[32768]{0}', space=vmem, size = 0x8000, scoped, tag = 'input window, operand 8, single buffered']
    #allocation12 [shape = 's32[1]{0}', space=sflag, size = 0x4, scoped, tag = 'scoped memory for tpu_custom_call.1']
    #allocation13 [shape = 'u8[8192]{0}', space=vmem, size = 0x2000, scoped, tag = 'output window, operand 0, single buffered']
    %15 = vsyncpa [#allocation3], 0
    %16 = vsyncpa [#allocation6], 0
    %17 = vsyncpa [#allocation9], 0
    %18 = vsyncpa [#allocation12], 0
    %19 = vsyncpa [#allocation4], 0
    // Predicated region
    $region2: #{tpu_custom_call.1} parent=1 // pred_check
      _
    $region3: #{tpu_custom_call.1} parent=1 // pred_check_branch
      %21 = sbr.rel (0) target = $region5
    $region4: #{tpu_custom_call.1} parent=1 // pred_region
      %s23 = ssub.s32 256, 256
      %24 = vsyncadd [#allocation3], %s23
      %s25 = sshll.u32 [#allocation2], 4
      %s26 = int_to_ptr.vmem [resolvable:$true] %s25
      %31 = dma.hbm_to_vmem [thread:$0]  %s0, 256, %s26, [#allocation3], 128, 128, 8
    $region5: #{tpu_custom_call.1} parent=1 // pred_fallthru
      _
    // Predicated region
    $region6: #{tpu_custom_call.1} parent=1 // pred_check
      _
    $region7: #{tpu_custom_call.1} parent=1 // pred_check_branch
      %33 = sbr.rel (0) target = $region9
    $region8: #{tpu_custom_call.1} parent=1 // pred_region
      %s35 = ssub.s32 6144, 6144
      %36 = vsyncadd [#allocation6], %s35
      %s37 = sshll.u32 [#allocation5], 4
      %s38 = int_to_ptr.vmem [resolvable:$true] %s37
      %43 = dma.hbm_to_vmem [thread:$0]  %s1, 6144, %s38, [#allocation6], 192, 192, 12
    $region9: #{tpu_custom_call.1} parent=1 // pred_fallthru
      _
    // Predicated region
    $region10: #{tpu_custom_call.1} parent=1 // pred_check
      _
    $region11: #{tpu_custom_call.1} parent=1 // pred_check_branch
      %45 = sbr.rel (0) target = $region13
    $region12: #{tpu_custom_call.1} parent=1 // pred_region
      %s47 = ssub.s32 2048, 2048
      %48 = vsyncadd [#allocation6], %s47
      %s49 = sshll.u32 [#allocation7], 4
      %s50 = int_to_ptr.vmem [resolvable:$true] %s49
      %55 = dma.hbm_to_vmem [thread:$0]  %s2, 2048, %s50, [#allocation6], 64, 64, 4
    $region13: #{tpu_custom_call.1} parent=1 // pred_fallthru
      _
    // Predicated region
    $region14: #{tpu_custom_call.1} parent=1 // pred_check
      _
    $region15: #{tpu_custom_call.1} parent=1 // pred_check_branch
      %57 = sbr.rel (0) target = $region17
    $region16: #{tpu_custom_call.1} parent=1 // pred_region
      %s59 = ssub.s32 2048, 2048
      %60 = vsyncadd [#allocation9], %s59
      %s61 = sshll.u32 [#allocation8], 4
      %s62 = int_to_ptr.vmem [resolvable:$true] %s61
      %67 = dma.hbm_to_vmem [thread:$0]  %s3, 2048, %s62, [#allocation9], 64, 64, 4
    $region17: #{tpu_custom_call.1} parent=1 // pred_fallthru
      _
    // Predicated region
    $region18: #{tpu_custom_call.1} parent=1 // pred_check
      _
    $region19: #{tpu_custom_call.1} parent=1 // pred_check_branch
      %69 = sbr.rel (0) target = $region21
    $region20: #{tpu_custom_call.1} parent=1 // pred_region
      %s71 = ssub.s32 2048, 2048
      %72 = vsyncadd [#allocation9], %s71
      %s73 = sshll.u32 [#allocation10], 4
      %s74 = int_to_ptr.vmem [resolvable:$true] %s73
      %79 = dma.hbm_to_vmem [thread:$0]  %s4, 2048, %s74, [#allocation9], 64, 64, 4
    $region21: #{tpu_custom_call.1} parent=1 // pred_fallthru
      _
    // Predicated region
    $region22: #{tpu_custom_call.1} parent=1 // pred_check
      _
    $region23: #{tpu_custom_call.1} parent=1 // pred_check_branch
      %81 = sbr.rel (0) target = $region25
    $region24: #{tpu_custom_call.1} parent=1 // pred_region
      _
    $region25: #{tpu_custom_call.1} parent=1 // pred_fallthru
      _
    // Predicated region
    $region26: #{tpu_custom_call.1} parent=1 // pred_check
      _
    $region27: #{tpu_custom_call.1} parent=1 // pred_check_branch
      %83 = sbr.rel (0) target = $region29
    $region28: #{tpu_custom_call.1} parent=1 // pred_region
      _
    $region29: #{tpu_custom_call.1} parent=1 // pred_fallthru
      _
    // Predicated region
    $region30: #{tpu_custom_call.1} parent=1 // pred_check
      _
    $region31: #{tpu_custom_call.1} parent=1 // pred_check_branch
      %85 = sbr.rel (0) target = $region33
    $region32: #{tpu_custom_call.1} parent=1 // pred_region
      _
    $region33: #{tpu_custom_call.1} parent=1 // pred_fallthru
      _
    // Predicated region
    $region34: #{tpu_custom_call.1} parent=1 // pred_check
      _
    $region35: #{tpu_custom_call.1} parent=1 // pred_check_branch
      %87 = sbr.rel (0) target = $region37
    $region36: #{tpu_custom_call.1} parent=1 // pred_region
      %s89 = ssub.s32 1024, 1024
      %90 = vsyncadd [#allocation12], %s89
      %s91 = sshll.u32 [#allocation11], 4
      %s92 = int_to_ptr.vmem [resolvable:$true] %s91
      %97 = dma.hbm_to_vmem [thread:$0]  %s8, 1024, %s92, [#allocation12], 64, 64, 4
    $region37: #{tpu_custom_call.1} parent=1 // pred_fallthru
      _
    // Predicated region
    $region38: #{tpu_custom_call.1} parent=1 // pred_check
      _
    $region39: #{tpu_custom_call.1} parent=1 // pred_check_branch
      %99 = sbr.rel (0) target = $region41
    $region40: #{tpu_custom_call.1} parent=1 // pred_region
      _
    $region41: #{tpu_custom_call.1} parent=1 // pred_fallthru
      _
    // Predicated region
    $region42: #{tpu_custom_call.1} parent=1 // pred_check
      _
    $region43: #{tpu_custom_call.1} parent=1 // pred_check_branch
      %101 = sbr.rel (0) target = $region45
    $region44: #{tpu_custom_call.1} parent=1 // pred_region
      %102 = dma.done [#allocation3], 256
    $region45: #{tpu_custom_call.1} parent=1 // pred_fallthru
      _
    // Predicated region
    $region46: #{tpu_custom_call.1} parent=1 // pred_check
      _
    $region47: #{tpu_custom_call.1} parent=1 // pred_check_branch
      %104 = sbr.rel (0) target = $region49
    $region48: #{tpu_custom_call.1} parent=1 // pred_region
      %105 = dma.done [#allocation6], 6144
    $region49: #{tpu_custom_call.1} parent=1 // pred_fallthru
      _
    // Predicated region
    $region50: #{tpu_custom_call.1} parent=1 // pred_check
      _
    $region51: #{tpu_custom_call.1} parent=1 // pred_check_branch
      %107 = sbr.rel (0) target = $region53
    $region52: #{tpu_custom_call.1} parent=1 // pred_region
      %108 = dma.done [#allocation6], 2048
    $region53: #{tpu_custom_call.1} parent=1 // pred_fallthru
      _
    // Predicated region
    $region54: #{tpu_custom_call.1} parent=1 // pred_check
      _
    $region55: #{tpu_custom_call.1} parent=1 // pred_check_branch
      %110 = sbr.rel (0) target = $region57
    $region56: #{tpu_custom_call.1} parent=1 // pred_region
      %111 = dma.done [#allocation9], 2048
    $region57: #{tpu_custom_call.1} parent=1 // pred_fallthru
      _
    // Predicated region
    $region58: #{tpu_custom_call.1} parent=1 // pred_check
      _
    $region59: #{tpu_custom_call.1} parent=1 // pred_check_branch
      %113 = sbr.rel (0) target = $region61
    $region60: #{tpu_custom_call.1} parent=1 // pred_region
      %114 = dma.done [#allocation9], 2048
    $region61: #{tpu_custom_call.1} parent=1 // pred_fallthru
      _
    // Predicated region
    $region62: #{tpu_custom_call.1} parent=1 // pred_check
      _
    $region63: #{tpu_custom_call.1} parent=1 // pred_check_branch
      %116 = sbr.rel (0) target = $region65
    $region64: #{tpu_custom_call.1} parent=1 // pred_region
      %117 = dma.done [#allocation12], 1024
    $region65: #{tpu_custom_call.1} parent=1 // pred_fallthru
      _
    %v119 = vld [vmem:[#allocation2] sm:$0xff]
    %v120 = vld [vmem:[#allocation2 + $0x8] sm:$0xff]
    %v121 = vpack.c.bf16 %v120, %v119
    %v122 = vld [vmem:[%s5] sm:$0xff]
    %v123 = vld [vmem:[%s6] sm:$0x1]
    %v124 = vld [vmem:[#allocation5] sm:$0xff]
    %v125 = vld [vmem:[#allocation5 + $0x8] sm:$0xf]
    %v126 = vld [vmem:[#allocation5 + $0xc] sm:$0xff]
    %v127 = vld [vmem:[#allocation5 + $0x14] sm:$0xf]
    %v128 = vld [vmem:[#allocation5 + $0x18] sm:$0xff]
    %v129 = vld [vmem:[#allocation5 + $0x20] sm:$0xf]
    %v130 = vld [vmem:[#allocation5 + $0x24] sm:$0xff]
    %v131 = vld [vmem:[#allocation5 + $0x2c] sm:$0xf]
    %v132 = vld [vmem:[#allocation5 + $0x30] sm:$0xff]
    %v133 = vld [vmem:[#allocation5 + $0x38] sm:$0xf]
    %v134 = vld [vmem:[#allocation5 + $0x3c] sm:$0xff]
    %v135 = vld [vmem:[#allocation5 + $0x44] sm:$0xf]
    %v136 = vld [vmem:[#allocation5 + $0x48] sm:$0xff]
    %v137 = vld [vmem:[#allocation5 + $0x50] sm:$0xf]
    %v138 = vld [vmem:[#allocation5 + $0x54] sm:$0xff]
    %v139 = vld [vmem:[#allocation5 + $0x5c] sm:$0xf]
    %v140 = vld [vmem:[#allocation5 + $0x60] sm:$0xff]
    %v141 = vld [vmem:[#allocation5 + $0x68] sm:$0xf]
    %v142 = vld [vmem:[#allocation5 + $0x6c] sm:$0xff]
    %v143 = vld [vmem:[#allocation5 + $0x74] sm:$0xf]
    %v144 = vld [vmem:[#allocation5 + $0x78] sm:$0xff]
    %v145 = vld [vmem:[#allocation5 + $0x80] sm:$0xf]
    %v146 = vld [vmem:[#allocation5 + $0x84] sm:$0xff]
    %v147 = vld [vmem:[#allocation5 + $0x8c] sm:$0xf]
    %v148 = vld [vmem:[#allocation5 + $0x90] sm:$0xff]
    %v149 = vld [vmem:[#allocation5 + $0x98] sm:$0xf]
    %v150 = vld [vmem:[#allocation5 + $0x9c] sm:$0xff]
    %v151 = vld [vmem:[#allocation5 + $0xa4] sm:$0xf]
    %v152 = vld [vmem:[#allocation5 + $0xa8] sm:$0xff]
    %v153 = vld [vmem:[#allocation5 + $0xb0] sm:$0xf]
    %v154 = vld [vmem:[#allocation5 + $0xb4] sm:$0xff]
    %v155 = vld [vmem:[#allocation5 + $0xbc] sm:$0xf]
    %v188 = vunpack.c.l.b16 %v124
    %v189 = vunpack.c.h.b16 %v124
    %v190 = vunpack.c.l.b16 %v125
    %v191 = vunpack.c.l.b16 %v126
    %v192 = vunpack.c.h.b16 %v126
    %v193 = vunpack.c.l.b16 %v127
    %v194 = vunpack.c.l.b16 %v128
    %v195 = vunpack.c.h.b16 %v128
    %v196 = vunpack.c.l.b16 %v129
    %v197 = vunpack.c.l.b16 %v130
    %v198 = vunpack.c.h.b16 %v130
    %v199 = vunpack.c.l.b16 %v131
    %v200 = vunpack.c.l.b16 %v132
    %v201 = vunpack.c.h.b16 %v132
    %v202 = vunpack.c.l.b16 %v133
    %v203 = vunpack.c.l.b16 %v134
    %v204 = vunpack.c.h.b16 %v134
    %v205 = vunpack.c.l.b16 %v135
    %v206 = vunpack.c.l.b16 %v136
    %v207 = vunpack.c.h.b16 %v136
    %v208 = vunpack.c.l.b16 %v137
    %v209 = vunpack.c.l.b16 %v138
    %v210 = vunpack.c.h.b16 %v138
    %v211 = vunpack.c.l.b16 %v139
    %v212 = vunpack.c.l.b16 %v140
    %v213 = vunpack.c.h.b16 %v140
    %v214 = vunpack.c.l.b16 %v141
    %v215 = vunpack.c.l.b16 %v142
    %v216 = vunpack.c.h.b16 %v142
    %v217 = vunpack.c.l.b16 %v143
    %v218 = vunpack.c.l.b16 %v144
    %v219 = vunpack.c.h.b16 %v144
    %v220 = vunpack.c.l.b16 %v145
    %v221 = vunpack.c.l.b16 %v146
    %v222 = vunpack.c.h.b16 %v146
    %v223 = vunpack.c.l.b16 %v147
    %v224 = vunpack.c.l.b16 %v148
    %v225 = vunpack.c.h.b16 %v148
    %v226 = vunpack.c.l.b16 %v149
    %v227 = vunpack.c.l.b16 %v150
    %v228 = vunpack.c.h.b16 %v150
    %v229 = vunpack.c.l.b16 %v151
    %v230 = vunpack.c.l.b16 %v152
    %v231 = vunpack.c.h.b16 %v152
    %v232 = vunpack.c.l.b16 %v153
    %v233 = vunpack.c.l.b16 %v154
    %v234 = vunpack.c.h.b16 %v154
    %v235 = vunpack.c.l.b16 %v155
    %v236 = vpack.c.b16 %v191, %v188
    %v237 = vpack.c.b16 %v192, %v189
    %v238 = vpack.c.b16 %v193, %v190
    %v239 = vpack.c.b16 %v197, %v194
    %v240 = vpack.c.b16 %v198, %v195
    %v241 = vpack.c.b16 %v199, %v196
    %v242 = vpack.c.b16 %v203, %v200
    %v243 = vpack.c.b16 %v204, %v201
    %v244 = vpack.c.b16 %v205, %v202
    %v245 = vpack.c.b16 %v209, %v206
    %v246 = vpack.c.b16 %v210, %v207
    %v247 = vpack.c.b16 %v211, %v208
    %v248 = vpack.c.b16 %v215, %v212
    %v249 = vpack.c.b16 %v216, %v213
    %v250 = vpack.c.b16 %v217, %v214
    %v251 = vpack.c.b16 %v221, %v218
    %v252 = vpack.c.b16 %v222, %v219
    %v253 = vpack.c.b16 %v223, %v220
    %v254 = vpack.c.b16 %v227, %v224
    %v255 = vpack.c.b16 %v228, %v225
    %v256 = vpack.c.b16 %v229, %v226
    %v257 = vpack.c.b16 %v233, %v230
    %v258 = vpack.c.b16 %v234, %v231
    %v259 = vpack.c.b16 %v235, %v232
    %284 = vmatprep.subr.bf16.mxu0 %v237
    %285 = vmatpush1.bf16.msra.mxu0 %v236
    %286 = vmatprep.subr.bf16.mxu0 %v240
    %287 = vmatpush1.bf16.msra.mxu0 %v239
    %288 = vmatprep.subr.bf16.mxu0 %v243
    %289 = vmatpush1.bf16.msra.mxu0 %v242
    %290 = vmatprep.subr.bf16.mxu0 %v246
    %291 = vmatpush1.bf16.msra.mxu0 %v245
    %292 = vmatprep.subr.bf16.mxu0 %v249
    %293 = vmatpush1.bf16.msra.mxu0 %v248
    %294 = vmatprep.subr.bf16.mxu0 %v252
    %295 = vmatpush1.bf16.msra.mxu0 %v251
    %296 = vmatprep.subr.bf16.mxu0 %v255
    %297 = vmatpush1.bf16.msra.mxu0 %v254
    %298 = vmatprep.subr.bf16.mxu0 %v258
    %299 = vmatpush1.bf16.msra.mxu0 %v257
    %300 = vmatprep.subr.bf16.mxu0 0
    %301 = vmatpush1.bf16.msra.mxu0 0
    %302 = vmatprep.subr.bf16.mxu0 0
    %303 = vmatpush1.bf16.msra.mxu0 0
    %304 = vmatprep.subr.bf16.mxu0 0
    %305 = vmatpush1.bf16.msra.mxu0 0
    %306 = vmatprep.subr.bf16.mxu0 0
    %307 = vmatpush1.bf16.msra.mxu0 0
    %308 = vmatprep.subr.bf16.mxu0 0
    %309 = vmatpush1.bf16.msra.mxu0 0
    %310 = vmatprep.subr.bf16.mxu0 0
    %311 = vmatpush1.bf16.msra.mxu0 0
    %312 = vmatprep.subr.bf16.mxu0 0
    %313 = vmatpush1.bf16.msra.mxu0 0
    %314 = vmatprep.subr.bf16.mxu0 0
    %315 = vmatpush1.bf16.msra.mxu0 0
    %316 = vmatprep.mubr.bf16.mxu0 0
    %317 = vmatmul.mubr.bf16.gmra.mrb[0].mxu0 %v121
    %v318 = vpop.f32.mrb[0].mxu0
    %v319 = vadd.f32 0.0, %v318
    %v320 = vpop.f32.mrb[0].mxu0
    %v321 = vadd.f32 0.0, %v320
    %v322 = vpop.f32.mrb[0].mxu0
    %v323 = vadd.f32 0.0, %v322
    %v324 = vpop.f32.mrb[0].mxu0
    %v325 = vadd.f32 0.0, %v324
    %326 = vdwg.mxu0
    %327 = vmatprep.subr.bf16.mxu0 0
    %328 = vmatpush1.bf16.msra.mxu0 %v238
    %329 = vmatprep.subr.bf16.mxu0 0
    %330 = vmatpush1.bf16.msra.mxu0 %v241
    %331 = vmatprep.subr.bf16.mxu0 0
    %332 = vmatpush1.bf16.msra.mxu0 %v244
    %333 = vmatprep.subr.bf16.mxu0 0
    %334 = vmatpush1.bf16.msra.mxu0 %v247
    %335 = vmatprep.subr.bf16.mxu0 0
    %336 = vmatpush1.bf16.msra.mxu0 %v250
    %337 = vmatprep.subr.bf16.mxu0 0
    %338 = vmatpush1.bf16.msra.mxu0 %v253
    %339 = vmatprep.subr.bf16.mxu0 0
    %340 = vmatpush1.bf16.msra.mxu0 %v256
    %341 = vmatprep.subr.bf16.mxu0 0
    %342 = vmatpush1.bf16.msra.mxu0 %v259
    %343 = vmatprep.subr.bf16.mxu0 0
    %344 = vmatpush1.bf16.msra.mxu0 0
    %345 = vmatprep.subr.bf16.mxu0 0
    %346 = vmatpush1.bf16.msra.mxu0 0
    %347 = vmatprep.subr.bf16.mxu0 0
    %348 = vmatpush1.bf16.msra.mxu0 0
    %349 = vmatprep.subr.bf16.mxu0 0
    %350 = vmatpush1.bf16.msra.mxu0 0
    %351 = vmatprep.subr.bf16.mxu0 0
    %352 = vmatpush1.bf16.msra.mxu0 0
    %353 = vmatprep.subr.bf16.mxu0 0
    %354 = vmatpush1.bf16.msra.mxu0 0
    %355 = vmatprep.subr.bf16.mxu0 0
    %356 = vmatpush1.bf16.msra.mxu0 0
    %357 = vmatprep.subr.bf16.mxu0 0
    %358 = vmatpush1.bf16.msra.mxu0 0
    %359 = vmatprep.mubr.bf16.mxu0 0
    %360 = vmatmul.mubr.bf16.gmra.mrb[0].mxu0 %v121
    %v361 = vpop.f32.mrb[0].mxu0
    %v362 = vadd.f32 0.0, %v361
    %v363 = vpop.f32.mrb[0].mxu0
    %v364 = vpop.f32.mrb[0].mxu0
    %v365 = vadd.f32 0.0, %v364
    %v366 = vpop.f32.mrb[0].mxu0
    %367 = vdwg.mxu0
    %v368 = vpack.c.bf16 %v323, %v319
    %v369 = vpack.c.bf16 %v325, %v321
    %v370 = vpack.c.bf16 %v365, %v362
    %v372 = vunpack.c.l.b16 %v368
    %v373 = vunpack.c.h.b16 %v368
    %v374 = vpack.c.b16 %v372, %v372
    %v375 = vpack.c.b16 %v373, %v373
    %v379 = vunpack.c.l.b16 %v369
    %v380 = vunpack.c.h.b16 %v369
    %v381 = vpack.c.b16 %v379, %v379
    %v382 = vpack.c.b16 %v380, %v380
    %v386 = vunpack.c.l.b16 %v370
    %v387 = vunpack.c.h.b16 %v370
    %v388 = vpack.c.b16 %v386, %v386
    %v389 = vpack.c.b16 %v387, %v387
    %390 = vmatprep.subr.bf16.mxu0 0
    %391 = vmatpush1.bf16.xpose.msra.mxu0 %v381
    %392 = vmatprep.subr.bf16.mxu0 0
    %393 = vmatpush1.bf16.xpose.msra.mxu0 0
    %394 = vmatprep.subr.bf16.mxu0 0
    %395 = vmatpush1.bf16.xpose.msra.mxu0 0
    %396 = vmatprep.subr.bf16.mxu0 0
    %397 = vmatpush1.bf16.xpose.msra.mxu0 0
    %398 = vmatprep.subr.bf16.mxu0 0
    %399 = vmatpush1.bf16.xpose.msra.mxu0 0
    %400 = vmatprep.subr.bf16.mxu0 0
    %401 = vmatpush1.bf16.xpose.msra.mxu0 0
    %402 = vmatprep.subr.bf16.mxu0 0
    %403 = vmatpush1.bf16.xpose.msra.mxu0 0
    %404 = vmatprep.subr.bf16.mxu0 0
    %405 = vmatpush1.bf16.xpose.msra.mxu0 0
    %406 = vmatprep.subr.bf16.mxu0 0
    %407 = vmatpush1.bf16.xpose.msra.mxu0 0
    %408 = vmatprep.subr.bf16.mxu0 0
    %409 = vmatpush1.bf16.xpose.msra.mxu0 0
    %410 = vmatprep.subr.bf16.mxu0 0
    %411 = vmatpush1.bf16.xpose.msra.mxu0 0
    %412 = vmatprep.subr.bf16.mxu0 0
    %413 = vmatpush1.bf16.xpose.msra.mxu0 0
    %414 = vmatprep.subr.bf16.mxu0 0
    %415 = vmatpush1.bf16.xpose.msra.mxu0 0
    %416 = vmatprep.subr.bf16.mxu0 0
    %417 = vmatpush1.bf16.xpose.msra.mxu0 0
    %418 = vmatprep.subr.bf16.mxu0 0
    %419 = vmatpush1.bf16.xpose.msra.mxu0 0
    %420 = vmatprep.subr.bf16.mxu0 0
    %421 = vmatpush1.bf16.xpose.msra.mxu0 0
    %422 = vmatprep.mubr.bf16.mxu0 0
    %423 = vmatmul.mubr.bf16.gmra.mrb[0].mxu0 %v374
    %v424 = vpop.f32.mrb[0].mxu0
    %v425 = vadd.f32 0.0, %v424
    %v426 = vpop.f32.mrb[0].mxu0
    %v427 = vpop.f32.mrb[0].mxu0
    %v428 = vpop.f32.mrb[0].mxu0
    %429 = vdwg.mxu0
    %430 = vmatprep.subr.bf16.mxu0 0
    %431 = vmatpush1.bf16.xpose.msra.mxu0 %v382
    %432 = vmatprep.subr.bf16.mxu0 0
    %433 = vmatpush1.bf16.xpose.msra.mxu0 0
    %434 = vmatprep.subr.bf16.mxu0 0
    %435 = vmatpush1.bf16.xpose.msra.mxu0 0
    %436 = vmatprep.subr.bf16.mxu0 0
    %437 = vmatpush1.bf16.xpose.msra.mxu0 0
    %438 = vmatprep.subr.bf16.mxu0 0
    %439 = vmatpush1.bf16.xpose.msra.mxu0 0
    %440 = vmatprep.subr.bf16.mxu0 0
    %441 = vmatpush1.bf16.xpose.msra.mxu0 0
    %442 = vmatprep.subr.bf16.mxu0 0
    %443 = vmatpush1.bf16.xpose.msra.mxu0 0
    %444 = vmatprep.subr.bf16.mxu0 0
    %445 = vmatpush1.bf16.xpose.msra.mxu0 0
    %446 = vmatprep.subr.bf16.mxu0 0
    %447 = vmatpush1.bf16.xpose.msra.mxu0 0
    %448 = vmatprep.subr.bf16.mxu0 0
    %449 = vmatpush1.bf16.xpose.msra.mxu0 0
    %450 = vmatprep.subr.bf16.mxu0 0
    %451 = vmatpush1.bf16.xpose.msra.mxu0 0
    %452 = vmatprep.subr.bf16.mxu0 0
    %453 = vmatpush1.bf16.xpose.msra.mxu0 0
    %454 = vmatprep.subr.bf16.mxu0 0
    %455 = vmatpush1.bf16.xpose.msra.mxu0 0
    %456 = vmatprep.subr.bf16.mxu0 0
    %457 = vmatpush1.bf16.xpose.msra.mxu0 0
    %458 = vmatprep.subr.bf16.mxu0 0
    %459 = vmatpush1.bf16.xpose.msra.mxu0 0
    %460 = vmatprep.subr.bf16.mxu0 0
    %461 = vmatpush1.bf16.xpose.msra.mxu0 0
    %462 = vmatprep.mubr.bf16.mxu0 0
    %463 = vmatmul.mubr.bf16.gmra.mrb[0].mxu0 %v375
    %v464 = vpop.f32.mrb[0].mxu0
    %v465 = vadd.f32 0.0, %v464
    %v466 = vpop.f32.mrb[0].mxu0
    %v467 = vpop.f32.mrb[0].mxu0
    %v468 = vpop.f32.mrb[0].mxu0
    %469 = vdwg.mxu0
    %vm470 = vcmask 64512
    %v471 = vsel %vm470, %v425, -inf
    %472 = vmax.xlane.f32.xlu0 %v471
    %v473 = vpop.xlane.xlu0 %472
    %v474 = vsel %vm470, %v465, -inf
    %475 = vmax.xlane.f32.xlu0 %v474
    %v476 = vpop.xlane.xlu0 %475
    %v477 = vsub.f32 %v425, %v473
    %v478 = vsub.f32 %v465, %v476
    %v479 = vmul.f32 %v477, 1.442695
    %v480 = vpow.pop %v479
    %v481 = vmul.f32 %v478, 1.442695
    %v482 = vpow.pop %v481
    %v483 = vsel %vm470, %v480, 0.0
    %484 = vadd.xlane.f32.xlu0 %v483
    %v485 = vpop.xlane.xlu0 %484
    %v486 = vsel %vm470, %v482, 0.0
    %487 = vadd.xlane.f32.xlu0 %v486
    %v488 = vpop.xlane.xlu0 %487
    %v489 = vrcp.pop %v485
    %v490 = vrcp.pop %v488
    %v491 = vmul.f32 %v480, %v489
    %v492 = vmul.f32 %v482, %v490
    %v493 = vpack.c.bf16 %v491, %v491
    %v494 = vpack.c.bf16 %v492, %v492
    %v496 = vsel %vm470, %v493, 0
    %vm498 = vcmask 1043456
    %v500 = vsel %vm498, %v388, 0
    %502 = vmatprep.subr.bf16.mxu0 0
    %503 = vmatpush1.bf16.msra.mxu0 %v500
    %504 = vmatprep.subr.bf16.mxu0 0
    %505 = vmatpush1.bf16.msra.mxu0 0
    %506 = vmatprep.subr.bf16.mxu0 0
    %507 = vmatpush1.bf16.msra.mxu0 0
    %508 = vmatprep.subr.bf16.mxu0 0
    %509 = vmatpush1.bf16.msra.mxu0 0
    %510 = vmatprep.subr.bf16.mxu0 0
    %511 = vmatpush1.bf16.msra.mxu0 0
    %512 = vmatprep.subr.bf16.mxu0 0
    %513 = vmatpush1.bf16.msra.mxu0 0
    %514 = vmatprep.subr.bf16.mxu0 0
    %515 = vmatpush1.bf16.msra.mxu0 0
    %516 = vmatprep.subr.bf16.mxu0 0
    %517 = vmatpush1.bf16.msra.mxu0 0
    %518 = vmatprep.subr.bf16.mxu0 0
    %519 = vmatpush1.bf16.msra.mxu0 0
    %520 = vmatprep.subr.bf16.mxu0 0
    %521 = vmatpush1.bf16.msra.mxu0 0
    %522 = vmatprep.subr.bf16.mxu0 0
    %523 = vmatpush1.bf16.msra.mxu0 0
    %524 = vmatprep.subr.bf16.mxu0 0
    %525 = vmatpush1.bf16.msra.mxu0 0
    %526 = vmatprep.subr.bf16.mxu0 0
    %527 = vmatpush1.bf16.msra.mxu0 0
    %528 = vmatprep.subr.bf16.mxu0 0
    %529 = vmatpush1.bf16.msra.mxu0 0
    %530 = vmatprep.subr.bf16.mxu0 0
    %531 = vmatpush1.bf16.msra.mxu0 0
    %532 = vmatprep.subr.bf16.mxu0 0
    %533 = vmatpush1.bf16.msra.mxu0 0
    %534 = vmatprep.mubr.bf16.mxu0 0
    %535 = vmatmul.mubr.bf16.gmra.mrb[0].mxu0 %v496
    %v536 = vpop.f32.mrb[0].mxu0
    %v537 = vadd.f32 0.0, %v536
    %v538 = vpop.f32.mrb[0].mxu0
    %v539 = vpop.f32.mrb[0].mxu0
    %v540 = vpop.f32.mrb[0].mxu0
    %541 = vdwg.mxu0
    %v543 = vsel %vm470, %v494, 0
    %v546 = vsel %vm498, %v389, 0
    %548 = vmatprep.subr.bf16.mxu0 0
    %549 = vmatpush1.bf16.msra.mxu0 %v546
    %550 = vmatprep.subr.bf16.mxu0 0
    %551 = vmatpush1.bf16.msra.mxu0 0
    %552 = vmatprep.subr.bf16.mxu0 0
    %553 = vmatpush1.bf16.msra.mxu0 0
    %554 = vmatprep.subr.bf16.mxu0 0
    %555 = vmatpush1.bf16.msra.mxu0 0
    %556 = vmatprep.subr.bf16.mxu0 0
    %557 = vmatpush1.bf16.msra.mxu0 0
    %558 = vmatprep.subr.bf16.mxu0 0
    %559 = vmatpush1.bf16.msra.mxu0 0
    %560 = vmatprep.subr.bf16.mxu0 0
    %561 = vmatpush1.bf16.msra.mxu0 0
    %562 = vmatprep.subr.bf16.mxu0 0
    %563 = vmatpush1.bf16.msra.mxu0 0
    %564 = vmatprep.subr.bf16.mxu0 0
    %565 = vmatpush1.bf16.msra.mxu0 0
    %566 = vmatprep.subr.bf16.mxu0 0
    %567 = vmatpush1.bf16.msra.mxu0 0
    %568 = vmatprep.subr.bf16.mxu0 0
    %569 = vmatpush1.bf16.msra.mxu0 0
    %570 = vmatprep.subr.bf16.mxu0 0
    %571 = vmatpush1.bf16.msra.mxu0 0
    %572 = vmatprep.subr.bf16.mxu0 0
    %573 = vmatpush1.bf16.msra.mxu0 0
    %574 = vmatprep.subr.bf16.mxu0 0
    %575 = vmatpush1.bf16.msra.mxu0 0
    %576 = vmatprep.subr.bf16.mxu0 0
    %577 = vmatpush1.bf16.msra.mxu0 0
    %578 = vmatprep.subr.bf16.mxu0 0
    %579 = vmatpush1.bf16.msra.mxu0 0
    %580 = vmatprep.mubr.bf16.mxu0 0
    %581 = vmatmul.mubr.bf16.gmra.mrb[0].mxu0 %v543
    %v582 = vpop.f32.mrb[0].mxu0
    %v583 = vadd.f32 0.0, %v582
    %v584 = vpop.f32.mrb[0].mxu0
    %v585 = vpop.f32.mrb[0].mxu0
    %v586 = vpop.f32.mrb[0].mxu0
    %587 = vdwg.mxu0
    %v588 = vpack.c.bf16 %v583, %v537
    %v589 = vld [vmem:[#allocation7] sm:$0xf]
    %v590 = vld [vmem:[#allocation7 + $0x4] sm:$0xf]
    %v591 = vld [vmem:[#allocation7 + $0x8] sm:$0xf]
    %v592 = vld [vmem:[#allocation7 + $0xc] sm:$0xf]
    %v593 = vld [vmem:[#allocation7 + $0x10] sm:$0xf]
    %v594 = vld [vmem:[#allocation7 + $0x14] sm:$0xf]
    %v595 = vld [vmem:[#allocation7 + $0x18] sm:$0xf]
    %v596 = vld [vmem:[#allocation7 + $0x1c] sm:$0xf]
    %v597 = vld [vmem:[#allocation7 + $0x20] sm:$0xf]
    %v598 = vld [vmem:[#allocation7 + $0x24] sm:$0xf]
    %v599 = vld [vmem:[#allocation7 + $0x28] sm:$0xf]
    %v600 = vld [vmem:[#allocation7 + $0x2c] sm:$0xf]
    %v601 = vld [vmem:[#allocation7 + $0x30] sm:$0xf]
    %v602 = vld [vmem:[#allocation7 + $0x34] sm:$0xf]
    %v603 = vld [vmem:[#allocation7 + $0x38] sm:$0xf]
    %v604 = vld [vmem:[#allocation7 + $0x3c] sm:$0xf]
    %v605 = vlaneseq
    %v606 = vshrl.u32 %v605, 7
    %v607 = vsub.s32 0, %v606
    %v608 = vrot.slane %v122, %v607
    %v625 = vunpack.c.l.b16 %v589
    %v626 = vunpack.c.l.b16 %v590
    %v627 = vunpack.c.l.b16 %v591
    %v628 = vunpack.c.l.b16 %v592
    %v629 = vunpack.c.l.b16 %v593
    %v630 = vunpack.c.l.b16 %v594
    %v631 = vunpack.c.l.b16 %v595
    %v632 = vunpack.c.l.b16 %v596
    %v633 = vunpack.c.l.b16 %v597
    %v634 = vunpack.c.l.b16 %v598
    %v635 = vunpack.c.l.b16 %v599
    %v636 = vunpack.c.l.b16 %v600
    %v637 = vunpack.c.l.b16 %v601
    %v638 = vunpack.c.l.b16 %v602
    %v639 = vunpack.c.l.b16 %v603
    %v640 = vunpack.c.l.b16 %v604
    %v641 = vpack.c.b16 %v626, %v625
    %v642 = vpack.c.b16 %v628, %v627
    %v643 = vpack.c.b16 %v630, %v629
    %v644 = vpack.c.b16 %v632, %v631
    %v645 = vpack.c.b16 %v634, %v633
    %v646 = vpack.c.b16 %v636, %v635
    %v647 = vpack.c.b16 %v638, %v637
    %v648 = vpack.c.b16 %v640, %v639
    %657 = vmatprep.subr.bf16.mxu0 0
    %658 = vmatpush1.bf16.msra.mxu0 %v641
    %659 = vmatprep.subr.bf16.mxu0 0
    %660 = vmatpush1.bf16.msra.mxu0 %v642
    %661 = vmatprep.subr.bf16.mxu0 0
    %662 = vmatpush1.bf16.msra.mxu0 %v643
    %663 = vmatprep.subr.bf16.mxu0 0
    %664 = vmatpush1.bf16.msra.mxu0 %v644
    %665 = vmatprep.subr.bf16.mxu0 0
    %666 = vmatpush1.bf16.msra.mxu0 %v645
    %667 = vmatprep.subr.bf16.mxu0 0
    %668 = vmatpush1.bf16.msra.mxu0 %v646
    %669 = vmatprep.subr.bf16.mxu0 0
    %670 = vmatpush1.bf16.msra.mxu0 %v647
    %671 = vmatprep.subr.bf16.mxu0 0
    %672 = vmatpush1.bf16.msra.mxu0 %v648
    %673 = vmatprep.subr.bf16.mxu0 0
    %674 = vmatpush1.bf16.msra.mxu0 0
    %675 = vmatprep.subr.bf16.mxu0 0
    %676 = vmatpush1.bf16.msra.mxu0 0
    %677 = vmatprep.subr.bf16.mxu0 0
    %678 = vmatpush1.bf16.msra.mxu0 0
    %679 = vmatprep.subr.bf16.mxu0 0
    %680 = vmatpush1.bf16.msra.mxu0 0
    %681 = vmatprep.subr.bf16.mxu0 0
    %682 = vmatpush1.bf16.msra.mxu0 0
    %683 = vmatprep.subr.bf16.mxu0 0
    %684 = vmatpush1.bf16.msra.mxu0 0
    %685 = vmatprep.subr.bf16.mxu0 0
    %686 = vmatpush1.bf16.msra.mxu0 0
    %687 = vmatprep.subr.bf16.mxu0 0
    %688 = vmatpush1.bf16.msra.mxu0 0
    %689 = vmatprep.mubr.bf16.mxu0 0
    %690 = vmatmul.mubr.bf16.gmra.mrb[0].mxu0 %v588
    %v691 = vpop.f32.mrb[0].mxu0
    %v692 = vadd.f32 %v608, %v691
    %v693 = vpop.f32.mrb[0].mxu0
    %v694 = vpop.f32.mrb[0].mxu0
    %v695 = vadd.f32 %v608, %v694
    %v696 = vpop.f32.mrb[0].mxu0
    %697 = vdwg.mxu0
    %v698 = vadd.f32 %v119, %v692
    %v699 = vadd.f32 %v120, %v695
    %700 = vadd.xlane.f32.xlu0 %v698
    %v701 = vpop.xlane.xlu0 %700
    %702 = vadd.xlane.f32.xlu0 %v699
    %v703 = vpop.xlane.xlu0 %702
    %v704 = vmul.f32 %v701, 0.03125
    %v705 = vmul.f32 %v703, 0.03125
    %v706 = vmul.f32 %v698, %v698
    %v707 = vmul.f32 %v699, %v699
    %708 = vadd.xlane.f32.xlu0 %v706
    %v709 = vpop.xlane.xlu0 %708
    %710 = vadd.xlane.f32.xlu0 %v707
    %v711 = vpop.xlane.xlu0 %710
    %v712 = vmul.f32 %v709, 0.03125
    %v713 = vmul.f32 %v711, 0.03125
    %v714 = vmul.f32 %v704, %v704
    %v715 = vmul.f32 %v705, %v705
    %v716 = vsub.f32 %v712, %v714
    %v717 = vsub.f32 %v713, %v715
    %v718 = vsub.f32 %v698, %v704
    %v719 = vsub.f32 %v699, %v705
    %v720 = vadd.f32 %v716, 1e-05
    %v721 = vadd.f32 %v717, 1e-05
    %v722 = vrsqrt.pop %v720
    %v723 = vrsqrt.pop %v721
    %v724 = vmul.f32 %v718, %v722
    %v725 = vmul.f32 %v719, %v723
    %v726 = vlaneseq
    %v727 = vshrl.u32 %v726, 7
    %v728 = vsub.s32 1, %v727
    %v729 = vrot.slane %v122, %v728
    %v730 = vmul.f32 %v724, %v729
    %v731 = vmul.f32 %v725, %v729
    %v732 = vlaneseq
    %v733 = vshrl.u32 %v732, 7
    %v734 = vsub.s32 2, %v733
    %v735 = vrot.slane %v122, %v734
    %v736 = vadd.f32 %v730, %v735
    %v737 = vadd.f32 %v731, %v735
    %v738 = vpack.c.bf16 %v737, %v736
    %v739 = vld [vmem:[#allocation8] sm:$0xf]
    %v740 = vld [vmem:[#allocation8 + $0x4] sm:$0xf]
    %v741 = vld [vmem:[#allocation8 + $0x8] sm:$0xf]
    %v742 = vld [vmem:[#allocation8 + $0xc] sm:$0xf]
    %v743 = vld [vmem:[#allocation8 + $0x10] sm:$0xf]
    %v744 = vld [vmem:[#allocation8 + $0x14] sm:$0xf]
    %v745 = vld [vmem:[#allocation8 + $0x18] sm:$0xf]
    %v746 = vld [vmem:[#allocation8 + $0x1c] sm:$0xf]
    %v747 = vld [vmem:[#allocation8 + $0x20] sm:$0xf]
    %v748 = vld [vmem:[#allocation8 + $0x24] sm:$0xf]
    %v749 = vld [vmem:[#allocation8 + $0x28] sm:$0xf]
    %v750 = vld [vmem:[#allocation8 + $0x2c] sm:$0xf]
    %v751 = vld [vmem:[#allocation8 + $0x30] sm:$0xf]
    %v752 = vld [vmem:[#allocation8 + $0x34] sm:$0xf]
    %v753 = vld [vmem:[#allocation8 + $0x38] sm:$0xf]
    %v754 = vld [vmem:[#allocation8 + $0x3c] sm:$0xf]
    %v756 = vlaneseq
    %v757 = vshrl.u32 %v756, 7
    %v758 = vsub.s32 0, %v757
    %v759 = vrot.slane %v123, %v758
    %v777 = vunpack.c.l.b16 %v739
    %v778 = vunpack.c.l.b16 %v740
    %v779 = vunpack.c.l.b16 %v741
    %v780 = vunpack.c.l.b16 %v742
    %v781 = vunpack.c.l.b16 %v743
    %v782 = vunpack.c.l.b16 %v744
    %v783 = vunpack.c.l.b16 %v745
    %v784 = vunpack.c.l.b16 %v746
    %v785 = vunpack.c.l.b16 %v747
    %v786 = vunpack.c.l.b16 %v748
    %v787 = vunpack.c.l.b16 %v749
    %v788 = vunpack.c.l.b16 %v750
    %v789 = vunpack.c.l.b16 %v751
    %v790 = vunpack.c.l.b16 %v752
    %v791 = vunpack.c.l.b16 %v753
    %v792 = vunpack.c.l.b16 %v754
    %v793 = vpack.c.b16 %v778, %v777
    %v794 = vpack.c.b16 %v780, %v779
    %v795 = vpack.c.b16 %v782, %v781
    %v796 = vpack.c.b16 %v784, %v783
    %v797 = vpack.c.b16 %v786, %v785
    %v798 = vpack.c.b16 %v788, %v787
    %v799 = vpack.c.b16 %v790, %v789
    %v800 = vpack.c.b16 %v792, %v791
    %809 = vmatprep.subr.bf16.mxu0 0
    %810 = vmatpush1.bf16.msra.mxu0 %v793
    %811 = vmatprep.subr.bf16.mxu0 0
    %812 = vmatpush1.bf16.msra.mxu0 %v794
    %813 = vmatprep.subr.bf16.mxu0 0
    %814 = vmatpush1.bf16.msra.mxu0 %v795
    %815 = vmatprep.subr.bf16.mxu0 0
    %816 = vmatpush1.bf16.msra.mxu0 %v796
    %817 = vmatprep.subr.bf16.mxu0 0
    %818 = vmatpush1.bf16.msra.mxu0 %v797
    %819 = vmatprep.subr.bf16.mxu0 0
    %820 = vmatpush1.bf16.msra.mxu0 %v798
    %821 = vmatprep.subr.bf16.mxu0 0
    %822 = vmatpush1.bf16.msra.mxu0 %v799
    %823 = vmatprep.subr.bf16.mxu0 0
    %824 = vmatpush1.bf16.msra.mxu0 %v800
    %825 = vmatprep.subr.bf16.mxu0 0
    %826 = vmatpush1.bf16.msra.mxu0 0
    %827 = vmatprep.subr.bf16.mxu0 0
    %828 = vmatpush1.bf16.msra.mxu0 0
    %829 = vmatprep.subr.bf16.mxu0 0
    %830 = vmatpush1.bf16.msra.mxu0 0
    %831 = vmatprep.subr.bf16.mxu0 0
    %832 = vmatpush1.bf16.msra.mxu0 0
    %833 = vmatprep.subr.bf16.mxu0 0
    %834 = vmatpush1.bf16.msra.mxu0 0
    %835 = vmatprep.subr.bf16.mxu0 0
    %836 = vmatpush1.bf16.msra.mxu0 0
    %837 = vmatprep.subr.bf16.mxu0 0
    %838 = vmatpush1.bf16.msra.mxu0 0
    %839 = vmatprep.subr.bf16.mxu0 0
    %840 = vmatpush1.bf16.msra.mxu0 0
    %841 = vmatprep.mubr.bf16.mxu0 0
    %842 = vmatmul.mubr.bf16.gmra.mrb[0].mxu0 %v738
    %v843 = vpop.f32.mrb[0].mxu0
    %v844 = vadd.f32 %v759, %v843
    %v845 = vpop.f32.mrb[0].mxu0
    %v846 = vpop.f32.mrb[0].mxu0
    %v847 = vadd.f32 %v759, %v846
    %v848 = vpop.f32.mrb[0].mxu0
    %849 = vdwg.mxu0
    %v850 = vmax.f32 %v844, 0.0
    %v851 = vmax.f32 %v847, 0.0
    %v852 = vpack.c.bf16 %v851, %v850
    %v853 = vld [vmem:[#allocation10] sm:$0xf]
    %v854 = vld [vmem:[#allocation10 + $0x4] sm:$0xf]
    %v855 = vld [vmem:[#allocation10 + $0x8] sm:$0xf]
    %v856 = vld [vmem:[#allocation10 + $0xc] sm:$0xf]
    %v857 = vld [vmem:[#allocation10 + $0x10] sm:$0xf]
    %v858 = vld [vmem:[#allocation10 + $0x14] sm:$0xf]
    %v859 = vld [vmem:[#allocation10 + $0x18] sm:$0xf]
    %v860 = vld [vmem:[#allocation10 + $0x1c] sm:$0xf]
    %v861 = vld [vmem:[#allocation10 + $0x20] sm:$0xf]
    %v862 = vld [vmem:[#allocation10 + $0x24] sm:$0xf]
    %v863 = vld [vmem:[#allocation10 + $0x28] sm:$0xf]
    %v864 = vld [vmem:[#allocation10 + $0x2c] sm:$0xf]
    %v865 = vld [vmem:[#allocation10 + $0x30] sm:$0xf]
    %v866 = vld [vmem:[#allocation10 + $0x34] sm:$0xf]
    %v867 = vld [vmem:[#allocation10 + $0x38] sm:$0xf]
    %v868 = vld [vmem:[#allocation10 + $0x3c] sm:$0xf]
    %v869 = vlaneseq
    %v870 = vshrl.u32 %v869, 7
    %v871 = vsub.s32 3, %v870
    %v872 = vrot.slane %v122, %v871
    %v889 = vunpack.c.l.b16 %v853
    %v890 = vunpack.c.l.b16 %v854
    %v891 = vunpack.c.l.b16 %v855
    %v892 = vunpack.c.l.b16 %v856
    %v893 = vunpack.c.l.b16 %v857
    %v894 = vunpack.c.l.b16 %v858
    %v895 = vunpack.c.l.b16 %v859
    %v896 = vunpack.c.l.b16 %v860
    %v897 = vunpack.c.l.b16 %v861
    %v898 = vunpack.c.l.b16 %v862
    %v899 = vunpack.c.l.b16 %v863
    %v900 = vunpack.c.l.b16 %v864
    %v901 = vunpack.c.l.b16 %v865
    %v902 = vunpack.c.l.b16 %v866
    %v903 = vunpack.c.l.b16 %v867
    %v904 = vunpack.c.l.b16 %v868
    %v905 = vpack.c.b16 %v890, %v889
    %v906 = vpack.c.b16 %v892, %v891
    %v907 = vpack.c.b16 %v894, %v893
    %v908 = vpack.c.b16 %v896, %v895
    %v909 = vpack.c.b16 %v898, %v897
    %v910 = vpack.c.b16 %v900, %v899
    %v911 = vpack.c.b16 %v902, %v901
    %v912 = vpack.c.b16 %v904, %v903
    %921 = vmatprep.subr.bf16.mxu0 0
    %922 = vmatpush1.bf16.msra.mxu0 %v905
    %923 = vmatprep.subr.bf16.mxu0 0
    %924 = vmatpush1.bf16.msra.mxu0 %v906
    %925 = vmatprep.subr.bf16.mxu0 0
    %926 = vmatpush1.bf16.msra.mxu0 %v907
    %927 = vmatprep.subr.bf16.mxu0 0
    %928 = vmatpush1.bf16.msra.mxu0 %v908
    %929 = vmatprep.subr.bf16.mxu0 0
    %930 = vmatpush1.bf16.msra.mxu0 %v909
    %931 = vmatprep.subr.bf16.mxu0 0
    %932 = vmatpush1.bf16.msra.mxu0 %v910
    %933 = vmatprep.subr.bf16.mxu0 0
    %934 = vmatpush1.bf16.msra.mxu0 %v911
    %935 = vmatprep.subr.bf16.mxu0 0
    %936 = vmatpush1.bf16.msra.mxu0 %v912
    %937 = vmatprep.subr.bf16.mxu0 0
    %938 = vmatpush1.bf16.msra.mxu0 0
    %939 = vmatprep.subr.bf16.mxu0 0
    %940 = vmatpush1.bf16.msra.mxu0 0
    %941 = vmatprep.subr.bf16.mxu0 0
    %942 = vmatpush1.bf16.msra.mxu0 0
    %943 = vmatprep.subr.bf16.mxu0 0
    %944 = vmatpush1.bf16.msra.mxu0 0
    %945 = vmatprep.subr.bf16.mxu0 0
    %946 = vmatpush1.bf16.msra.mxu0 0
    %947 = vmatprep.subr.bf16.mxu0 0
    %948 = vmatpush1.bf16.msra.mxu0 0
    %949 = vmatprep.subr.bf16.mxu0 0
    %950 = vmatpush1.bf16.msra.mxu0 0
    %951 = vmatprep.subr.bf16.mxu0 0
    %952 = vmatpush1.bf16.msra.mxu0 0
    %953 = vmatprep.mubr.bf16.mxu0 0
    %954 = vmatmul.mubr.bf16.gmra.mrb[0].mxu0 %v852
    %v955 = vpop.f32.mrb[0].mxu0
    %v956 = vadd.f32 %v872, %v955
    %v957 = vpop.f32.mrb[0].mxu0
    %v958 = vpop.f32.mrb[0].mxu0
    %v959 = vadd.f32 %v872, %v958
    %v960 = vpop.f32.mrb[0].mxu0
    %961 = vdwg.mxu0
    %v962 = vadd.f32 %v736, %v956
    %v963 = vadd.f32 %v737, %v959
    %964 = vadd.xlane.f32.xlu0 %v962
    %v965 = vpop.xlane.xlu0 %964
    %966 = vadd.xlane.f32.xlu0 %v963
    %v967 = vpop.xlane.xlu0 %966
    %v968 = vmul.f32 %v965, 0.03125
    %v969 = vmul.f32 %v967, 0.03125
    %v970 = vmul.f32 %v962, %v962
    %v971 = vmul.f32 %v963, %v963
    %972 = vadd.xlane.f32.xlu0 %v970
    %v973 = vpop.xlane.xlu0 %972
    %974 = vadd.xlane.f32.xlu0 %v971
    %v975 = vpop.xlane.xlu0 %974
    %v976 = vmul.f32 %v973, 0.03125
    %v977 = vmul.f32 %v975, 0.03125
    %v978 = vmul.f32 %v968, %v968
    %v979 = vmul.f32 %v969, %v969
    %v980 = vsub.f32 %v976, %v978
    %v981 = vsub.f32 %v977, %v979
    %v982 = vsub.f32 %v962, %v968
    %v983 = vsub.f32 %v963, %v969
    %v984 = vadd.f32 %v980, 1e-05
    %v985 = vadd.f32 %v981, 1e-05
    %v986 = vrsqrt.pop %v984
    %v987 = vrsqrt.pop %v985
    %v988 = vmul.f32 %v982, %v986
    %v989 = vmul.f32 %v983, %v987
    %v990 = vlaneseq
    %v991 = vshrl.u32 %v990, 7
    %v992 = vsub.s32 4, %v991
    %v993 = vrot.slane %v122, %v992
    %v994 = vmul.f32 %v988, %v993
    %v995 = vmul.f32 %v989, %v993
    %v996 = vlaneseq
    %v997 = vshrl.u32 %v996, 7
    %v998 = vsub.s32 5, %v997
    %v999 = vrot.slane %v122, %v998
    %v1000 = vadd.f32 %v994, %v999
    %v1001 = vadd.f32 %v995, %v999
    %v1002 = vpack.c.bf16 %v1001, %v1000
    %s1003 = scalar_lea.vmem %s5, 8
    %v1004 = vld [vmem:[%s1003] sm:$0xff]
    %s1005 = scalar_lea.vmem %s6, 1
    %v1006 = vld [vmem:[%s1005] sm:$0x1]
    %s1007 = scalar_lea.vmem [#allocation5], 192
    %v1008 = vld [vmem:[%s1007] sm:$0xff]
    %v1009 = vld [vmem:[%s1007 + $0x8] sm:$0xf]
    %v1010 = vld [vmem:[%s1007 + $0xc] sm:$0xff]
    %v1011 = vld [vmem:[%s1007 + $0x14] sm:$0xf]
    %v1012 = vld [vmem:[%s1007 + $0x18] sm:$0xff]
    %v1013 = vld [vmem:[%s1007 + $0x20] sm:$0xf]
    %v1014 = vld [vmem:[%s1007 + $0x24] sm:$0xff]
    %v1015 = vld [vmem:[%s1007 + $0x2c] sm:$0xf]
    %v1016 = vld [vmem:[%s1007 + $0x30] sm:$0xff]
    %v1017 = vld [vmem:[%s1007 + $0x38] sm:$0xf]
    %v1018 = vld [vmem:[%s1007 + $0x3c] sm:$0xff]
    %v1019 = vld [vmem:[%s1007 + $0x44] sm:$0xf]
    %v1020 = vld [vmem:[%s1007 + $0x48] sm:$0xff]
    %v1021 = vld [vmem:[%s1007 + $0x50] sm:$0xf]
    %v1022 = vld [vmem:[%s1007 + $0x54] sm:$0xff]
    %v1023 = vld [vmem:[%s1007 + $0x5c] sm:$0xf]
    %v1024 = vld [vmem:[%s1007 + $0x60] sm:$0xff]
    %v1025 = vld [vmem:[%s1007 + $0x68] sm:$0xf]
    %v1026 = vld [vmem:[%s1007 + $0x6c] sm:$0xff]
    %v1027 = vld [vmem:[%s1007 + $0x74] sm:$0xf]
    %v1028 = vld [vmem:[%s1007 + $0x78] sm:$0xff]
    %v1029 = vld [vmem:[%s1007 + $0x80] sm:$0xf]
    %v1030 = vld [vmem:[%s1007 + $0x84] sm:$0xff]
    %v1031 = vld [vmem:[%s1007 + $0x8c] sm:$0xf]
    %v1032 = vld [vmem:[%s1007 + $0x90] sm:$0xff]
    %v1033 = vld [vmem:[%s1007 + $0x98] sm:$0xf]
    %v1034 = vld [vmem:[%s1007 + $0x9c] sm:$0xff]
    %v1035 = vld [vmem:[%s1007 + $0xa4] sm:$0xf]
    %v1036 = vld [vmem:[%s1007 + $0xa8] sm:$0xff]
    %v1037 = vld [vmem:[%s1007 + $0xb0] sm:$0xf]
    %v1038 = vld [vmem:[%s1007 + $0xb4] sm:$0xff]
    %v1039 = vld [vmem:[%s1007 + $0xbc] sm:$0xf]
    %v1072 = vunpack.c.l.b16 %v1008
    %v1073 = vunpack.c.h.b16 %v1008
    %v1074 = vunpack.c.l.b16 %v1009
    %v1075 = vunpack.c.l.b16 %v1010
    %v1076 = vunpack.c.h.b16 %v1010
    %v1077 = vunpack.c.l.b16 %v1011
    %v1078 = vunpack.c.l.b16 %v1012
    %v1079 = vunpack.c.h.b16 %v1012
    %v1080 = vunpack.c.l.b16 %v1013
    %v1081 = vunpack.c.l.b16 %v1014
    %v1082 = vunpack.c.h.b16 %v1014
    %v1083 = vunpack.c.l.b16 %v1015
    %v1084 = vunpack.c.l.b16 %v1016
    %v1085 = vunpack.c.h.b16 %v1016
    %v1086 = vunpack.c.l.b16 %v1017
    %v1087 = vunpack.c.l.b16 %v1018
    %v1088 = vunpack.c.h.b16 %v1018
    %v1089 = vunpack.c.l.b16 %v1019
    %v1090 = vunpack.c.l.b16 %v1020
    %v1091 = vunpack.c.h.b16 %v1020
    %v1092 = vunpack.c.l.b16 %v1021
    %v1093 = vunpack.c.l.b16 %v1022
    %v1094 = vunpack.c.h.b16 %v1022
    %v1095 = vunpack.c.l.b16 %v1023
    %v1096 = vunpack.c.l.b16 %v1024
    %v1097 = vunpack.c.h.b16 %v1024
    %v1098 = vunpack.c.l.b16 %v1025
    %v1099 = vunpack.c.l.b16 %v1026
    %v1100 = vunpack.c.h.b16 %v1026
    %v1101 = vunpack.c.l.b16 %v1027
    %v1102 = vunpack.c.l.b16 %v1028
    %v1103 = vunpack.c.h.b16 %v1028
    %v1104 = vunpack.c.l.b16 %v1029
    %v1105 = vunpack.c.l.b16 %v1030
    %v1106 = vunpack.c.h.b16 %v1030
    %v1107 = vunpack.c.l.b16 %v1031
    %v1108 = vunpack.c.l.b16 %v1032
    %v1109 = vunpack.c.h.b16 %v1032
    %v1110 = vunpack.c.l.b16 %v1033
    %v1111 = vunpack.c.l.b16 %v1034
    %v1112 = vunpack.c.h.b16 %v1034
    %v1113 = vunpack.c.l.b16 %v1035
    %v1114 = vunpack.c.l.b16 %v1036
    %v1115 = vunpack.c.h.b16 %v1036
    %v1116 = vunpack.c.l.b16 %v1037
    %v1117 = vunpack.c.l.b16 %v1038
    %v1118 = vunpack.c.h.b16 %v1038
    %v1119 = vunpack.c.l.b16 %v1039
    %v1120 = vpack.c.b16 %v1075, %v1072
    %v1121 = vpack.c.b16 %v1076, %v1073
    %v1122 = vpack.c.b16 %v1077, %v1074
    %v1123 = vpack.c.b16 %v1081, %v1078
    %v1124 = vpack.c.b16 %v1082, %v1079
    %v1125 = vpack.c.b16 %v1083, %v1080
    %v1126 = vpack.c.b16 %v1087, %v1084
    %v1127 = vpack.c.b16 %v1088, %v1085
    %v1128 = vpack.c.b16 %v1089, %v1086
    %v1129 = vpack.c.b16 %v1093, %v1090
    %v1130 = vpack.c.b16 %v1094, %v1091
    %v1131 = vpack.c.b16 %v1095, %v1092
    %v1132 = vpack.c.b16 %v1099, %v1096
    %v1133 = vpack.c.b16 %v1100, %v1097
    %v1134 = vpack.c.b16 %v1101, %v1098
    %v1135 = vpack.c.b16 %v1105, %v1102
    %v1136 = vpack.c.b16 %v1106, %v1103
    %v1137 = vpack.c.b16 %v1107, %v1104
    %v1138 = vpack.c.b16 %v1111, %v1108
    %v1139 = vpack.c.b16 %v1112, %v1109
    %v1140 = vpack.c.b16 %v1113, %v1110
    %v1141 = vpack.c.b16 %v1117, %v1114
    %v1142 = vpack.c.b16 %v1118, %v1115
    %v1143 = vpack.c.b16 %v1119, %v1116
    %1168 = vmatprep.subr.bf16.mxu0 %v1121
    %1169 = vmatpush1.bf16.msra.mxu0 %v1120
    %1170 = vmatprep.subr.bf16.mxu0 %v1124
    %1171 = vmatpush1.bf16.msra.mxu0 %v1123
    %1172 = vmatprep.subr.bf16.mxu0 %v1127
    %1173 = vmatpush1.bf16.msra.mxu0 %v1126
    %1174 = vmatprep.subr.bf16.mxu0 %v1130
    %1175 = vmatpush1.bf16.msra.mxu0 %v1129
    %1176 = vmatprep.subr.bf16.mxu0 %v1133
    %1177 = vmatpush1.bf16.msra.mxu0 %v1132
    %1178 = vmatprep.subr.bf16.mxu0 %v1136
    %1179 = vmatpush1.bf16.msra.mxu0 %v1135
    %1180 = vmatprep.subr.bf16.mxu0 %v1139
    %1181 = vmatpush1.bf16.msra.mxu0 %v1138
    %1182 = vmatprep.subr.bf16.mxu0 %v1142
    %1183 = vmatpush1.bf16.msra.mxu0 %v1141
    %1184 = vmatprep.subr.bf16.mxu0 0
    %1185 = vmatpush1.bf16.msra.mxu0 0
    %1186 = vmatprep.subr.bf16.mxu0 0
    %1187 = vmatpush1.bf16.msra.mxu0 0
    %1188 = vmatprep.subr.bf16.mxu0 0
    %1189 = vmatpush1.bf16.msra.mxu0 0
    %1190 = vmatprep.subr.bf16.mxu0 0
    %1191 = vmatpush1.bf16.msra.mxu0 0
    %1192 = vmatprep.subr.bf16.mxu0 0
    %1193 = vmatpush1.bf16.msra.mxu0 0
    %1194 = vmatprep.subr.bf16.mxu0 0
    %1195 = vmatpush1.bf16.msra.mxu0 0
    %1196 = vmatprep.subr.bf16.mxu0 0
    %1197 = vmatpush1.bf16.msra.mxu0 0
    %1198 = vmatprep.subr.bf16.mxu0 0
    %1199 = vmatpush1.bf16.msra.mxu0 0
    %1200 = vmatprep.mubr.bf16.mxu0 0
    %1201 = vmatmul.mubr.bf16.gmra.mrb[0].mxu0 %v1002
    %v1202 = vpop.f32.mrb[0].mxu0
    %v1203 = vadd.f32 0.0, %v1202
    %v1204 = vpop.f32.mrb[0].mxu0
    %v1205 = vadd.f32 0.0, %v1204
    %v1206 = vpop.f32.mrb[0].mxu0
    %v1207 = vadd.f32 0.0, %v1206
    %v1208 = vpop.f32.mrb[0].mxu0
    %v1209 = vadd.f32 0.0, %v1208
    %1210 = vdwg.mxu0
    %1211 = vmatprep.subr.bf16.mxu0 0
    %1212 = vmatpush1.bf16.msra.mxu0 %v1122
    %1213 = vmatprep.subr.bf16.mxu0 0
    %1214 = vmatpush1.bf16.msra.mxu0 %v1125
    %1215 = vmatprep.subr.bf16.mxu0 0
    %1216 = vmatpush1.bf16.msra.mxu0 %v1128
    %1217 = vmatprep.subr.bf16.mxu0 0
    %1218 = vmatpush1.bf16.msra.mxu0 %v1131
    %1219 = vmatprep.subr.bf16.mxu0 0
    %1220 = vmatpush1.bf16.msra.mxu0 %v1134
    %1221 = vmatprep.subr.bf16.mxu0 0
    %1222 = vmatpush1.bf16.msra.mxu0 %v1137
    %1223 = vmatprep.subr.bf16.mxu0 0
    %1224 = vmatpush1.bf16.msra.mxu0 %v1140
    %1225 = vmatprep.subr.bf16.mxu0 0
    %1226 = vmatpush1.bf16.msra.mxu0 %v1143
    %1227 = vmatprep.subr.bf16.mxu0 0
    %1228 = vmatpush1.bf16.msra.mxu0 0
    %1229 = vmatprep.subr.bf16.mxu0 0
    %1230 = vmatpush1.bf16.msra.mxu0 0
    %1231 = vmatprep.subr.bf16.mxu0 0
    %1232 = vmatpush1.bf16.msra.mxu0 0
    %1233 = vmatprep.subr.bf16.mxu0 0
    %1234 = vmatpush1.bf16.msra.mxu0 0
    %1235 = vmatprep.subr.bf16.mxu0 0
    %1236 = vmatpush1.bf16.msra.mxu0 0
    %1237 = vmatprep.subr.bf16.mxu0 0
    %1238 = vmatpush1.bf16.msra.mxu0 0
    %1239 = vmatprep.subr.bf16.mxu0 0
    %1240 = vmatpush1.bf16.msra.mxu0 0
    %1241 = vmatprep.subr.bf16.mxu0 0
    %1242 = vmatpush1.bf16.msra.mxu0 0
    %1243 = vmatprep.mubr.bf16.mxu0 0
    %1244 = vmatmul.mubr.bf16.gmra.mrb[0].mxu0 %v1002
    %v1245 = vpop.f32.mrb[0].mxu0
    %v1246 = vadd.f32 0.0, %v1245
    %v1247 = vpop.f32.mrb[0].mxu0
    %v1248 = vpop.f32.mrb[0].mxu0
    %v1249 = vadd.f32 0.0, %v1248
    %v1250 = vpop.f32.mrb[0].mxu0
    %1251 = vdwg.mxu0
    %v1252 = vpack.c.bf16 %v1207, %v1203
    %v1253 = vpack.c.bf16 %v1209, %v1205
    %v1254 = vpack.c.bf16 %v1249, %v1246
    %v1256 = vunpack.c.l.b16 %v1252
    %v1257 = vunpack.c.h.b16 %v1252
    %v1258 = vpack.c.b16 %v1256, %v1256
    %v1259 = vpack.c.b16 %v1257, %v1257
    %v1263 = vunpack.c.l.b16 %v1253
    %v1264 = vunpack.c.h.b16 %v1253
    %v1265 = vpack.c.b16 %v1263, %v1263
    %v1266 = vpack.c.b16 %v1264, %v1264
    %v1270 = vunpack.c.l.b16 %v1254
    %v1271 = vunpack.c.h.b16 %v1254
    %v1272 = vpack.c.b16 %v1270, %v1270
    %v1273 = vpack.c.b16 %v1271, %v1271
    %1274 = vmatprep.subr.bf16.mxu0 0
    %1275 = vmatpush1.bf16.xpose.msra.mxu0 %v1265
    %1276 = vmatprep.subr.bf16.mxu0 0
    %1277 = vmatpush1.bf16.xpose.msra.mxu0 0
    %1278 = vmatprep.subr.bf16.mxu0 0
    %1279 = vmatpush1.bf16.xpose.msra.mxu0 0
    %1280 = vmatprep.subr.bf16.mxu0 0
    %1281 = vmatpush1.bf16.xpose.msra.mxu0 0
    %1282 = vmatprep.subr.bf16.mxu0 0
    %1283 = vmatpush1.bf16.xpose.msra.mxu0 0
    %1284 = vmatprep.subr.bf16.mxu0 0
    %1285 = vmatpush1.bf16.xpose.msra.mxu0 0
    %1286 = vmatprep.subr.bf16.mxu0 0
    %1287 = vmatpush1.bf16.xpose.msra.mxu0 0
    %1288 = vmatprep.subr.bf16.mxu0 0
    %1289 = vmatpush1.bf16.xpose.msra.mxu0 0
    %1290 = vmatprep.subr.bf16.mxu0 0
    %1291 = vmatpush1.bf16.xpose.msra.mxu0 0
    %1292 = vmatprep.subr.bf16.mxu0 0
    %1293 = vmatpush1.bf16.xpose.msra.mxu0 0
    %1294 = vmatprep.subr.bf16.mxu0 0
    %1295 = vmatpush1.bf16.xpose.msra.mxu0 0
    %1296 = vmatprep.subr.bf16.mxu0 0
    %1297 = vmatpush1.bf16.xpose.msra.mxu0 0
    %1298 = vmatprep.subr.bf16.mxu0 0
    %1299 = vmatpush1.bf16.xpose.msra.mxu0 0
    %1300 = vmatprep.subr.bf16.mxu0 0
    %1301 = vmatpush1.bf16.xpose.msra.mxu0 0
    %1302 = vmatprep.subr.bf16.mxu0 0
    %1303 = vmatpush1.bf16.xpose.msra.mxu0 0
    %1304 = vmatprep.subr.bf16.mxu0 0
    %1305 = vmatpush1.bf16.xpose.msra.mxu0 0
    %1306 = vmatprep.mubr.bf16.mxu0 0
    %1307 = vmatmul.mubr.bf16.gmra.mrb[0].mxu0 %v1258
    %v1308 = vpop.f32.mrb[0].mxu0
    %v1309 = vadd.f32 0.0, %v1308
    %v1310 = vpop.f32.mrb[0].mxu0
    %v1311 = vpop.f32.mrb[0].mxu0
    %v1312 = vpop.f32.mrb[0].mxu0
    %1313 = vdwg.mxu0
    %1314 = vmatprep.subr.bf16.mxu0 0
    %1315 = vmatpush1.bf16.xpose.msra.mxu0 %v1266
    %1316 = vmatprep.subr.bf16.mxu0 0
    %1317 = vmatpush1.bf16.xpose.msra.mxu0 0
    %1318 = vmatprep.subr.bf16.mxu0 0
    %1319 = vmatpush1.bf16.xpose.msra.mxu0 0
    %1320 = vmatprep.subr.bf16.mxu0 0
    %1321 = vmatpush1.bf16.xpose.msra.mxu0 0
    %1322 = vmatprep.subr.bf16.mxu0 0
    %1323 = vmatpush1.bf16.xpose.msra.mxu0 0
    %1324 = vmatprep.subr.bf16.mxu0 0
    %1325 = vmatpush1.bf16.xpose.msra.mxu0 0
    %1326 = vmatprep.subr.bf16.mxu0 0
    %1327 = vmatpush1.bf16.xpose.msra.mxu0 0
    %1328 = vmatprep.subr.bf16.mxu0 0
    %1329 = vmatpush1.bf16.xpose.msra.mxu0 0
    %1330 = vmatprep.subr.bf16.mxu0 0
    %1331 = vmatpush1.bf16.xpose.msra.mxu0 0
    %1332 = vmatprep.subr.bf16.mxu0 0
    %1333 = vmatpush1.bf16.xpose.msra.mxu0 0
    %1334 = vmatprep.subr.bf16.mxu0 0
    %1335 = vmatpush1.bf16.xpose.msra.mxu0 0
    %1336 = vmatprep.subr.bf16.mxu0 0
    %1337 = vmatpush1.bf16.xpose.msra.mxu0 0
    %1338 = vmatprep.subr.bf16.mxu0 0
    %1339 = vmatpush1.bf16.xpose.msra.mxu0 0
    %1340 = vmatprep.subr.bf16.mxu0 0
    %1341 = vmatpush1.bf16.xpose.msra.mxu0 0
    %1342 = vmatprep.subr.bf16.mxu0 0
    %1343 = vmatpush1.bf16.xpose.msra.mxu0 0
    %1344 = vmatprep.subr.bf16.mxu0 0
    %1345 = vmatpush1.bf16.xpose.msra.mxu0 0
    %1346 = vmatprep.mubr.bf16.mxu0 0
    %1347 = vmatmul.mubr.bf16.gmra.mrb[0].mxu0 %v1259
    %v1348 = vpop.f32.mrb[0].mxu0
    %v1349 = vadd.f32 0.0, %v1348
    %v1350 = vpop.f32.mrb[0].mxu0
    %v1351 = vpop.f32.mrb[0].mxu0
    %v1352 = vpop.f32.mrb[0].mxu0
    %1353 = vdwg.mxu0
    %v1354 = vsel %vm470, %v1309, -inf
    %1355 = vmax.xlane.f32.xlu0 %v1354
    %v1356 = vpop.xlane.xlu0 %1355
    %v1357 = vsel %vm470, %v1349, -inf
    %1358 = vmax.xlane.f32.xlu0 %v1357
    %v1359 = vpop.xlane.xlu0 %1358
    %v1360 = vsub.f32 %v1309, %v1356
    %v1361 = vsub.f32 %v1349, %v1359
    %v1362 = vmul.f32 %v1360, 1.442695
    %v1363 = vpow.pop %v1362
    %v1364 = vmul.f32 %v1361, 1.442695
    %v1365 = vpow.pop %v1364
    %v1366 = vsel %vm470, %v1363, 0.0
    %1367 = vadd.xlane.f32.xlu0 %v1366
    %v1368 = vpop.xlane.xlu0 %1367
    %v1369 = vsel %vm470, %v1365, 0.0
    %1370 = vadd.xlane.f32.xlu0 %v1369
    %v1371 = vpop.xlane.xlu0 %1370
    %v1372 = vrcp.pop %v1368
    %v1373 = vrcp.pop %v1371
    %v1374 = vmul.f32 %v1363, %v1372
    %v1375 = vmul.f32 %v1365, %v1373
    %v1376 = vpack.c.bf16 %v1374, %v1374
    %v1377 = vpack.c.bf16 %v1375, %v1375
    %v1379 = vsel %vm470, %v1376, 0
    %v1382 = vsel %vm498, %v1272, 0
    %1384 = vmatprep.subr.bf16.mxu0 0
    %1385 = vmatpush1.bf16.msra.mxu0 %v1382
    %1386 = vmatprep.subr.bf16.mxu0 0
    %1387 = vmatpush1.bf16.msra.mxu0 0
    %1388 = vmatprep.subr.bf16.mxu0 0
    %1389 = vmatpush1.bf16.msra.mxu0 0
    %1390 = vmatprep.subr.bf16.mxu0 0
    %1391 = vmatpush1.bf16.msra.mxu0 0
    %1392 = vmatprep.subr.bf16.mxu0 0
    %1393 = vmatpush1.bf16.msra.mxu0 0
    %1394 = vmatprep.subr.bf16.mxu0 0
    %1395 = vmatpush1.bf16.msra.mxu0 0
    %1396 = vmatprep.subr.bf16.mxu0 0
    %1397 = vmatpush1.bf16.msra.mxu0 0
    %1398 = vmatprep.subr.bf16.mxu0 0
    %1399 = vmatpush1.bf16.msra.mxu0 0
    %1400 = vmatprep.subr.bf16.mxu0 0
    %1401 = vmatpush1.bf16.msra.mxu0 0
    %1402 = vmatprep.subr.bf16.mxu0 0
    %1403 = vmatpush1.bf16.msra.mxu0 0
    %1404 = vmatprep.subr.bf16.mxu0 0
    %1405 = vmatpush1.bf16.msra.mxu0 0
    %1406 = vmatprep.subr.bf16.mxu0 0
    %1407 = vmatpush1.bf16.msra.mxu0 0
    %1408 = vmatprep.subr.bf16.mxu0 0
    %1409 = vmatpush1.bf16.msra.mxu0 0
    %1410 = vmatprep.subr.bf16.mxu0 0
    %1411 = vmatpush1.bf16.msra.mxu0 0
    %1412 = vmatprep.subr.bf16.mxu0 0
    %1413 = vmatpush1.bf16.msra.mxu0 0
    %1414 = vmatprep.subr.bf16.mxu0 0
    %1415 = vmatpush1.bf16.msra.mxu0 0
    %1416 = vmatprep.mubr.bf16.mxu0 0
    %1417 = vmatmul.mubr.bf16.gmra.mrb[0].mxu0 %v1379
    %v1418 = vpop.f32.mrb[0].mxu0
    %v1419 = vadd.f32 0.0, %v1418
    %v1420 = vpop.f32.mrb[0].mxu0
    %v1421 = vpop.f32.mrb[0].mxu0
    %v1422 = vpop.f32.mrb[0].mxu0
    %1423 = vdwg.mxu0
    %v1425 = vsel %vm470, %v1377, 0
    %v1428 = vsel %vm498, %v1273, 0
    %1430 = vmatprep.subr.bf16.mxu0 0
    %1431 = vmatpush1.bf16.msra.mxu0 %v1428
    %1432 = vmatprep.subr.bf16.mxu0 0
    %1433 = vmatpush1.bf16.msra.mxu0 0
    %1434 = vmatprep.subr.bf16.mxu0 0
    %1435 = vmatpush1.bf16.msra.mxu0 0
    %1436 = vmatprep.subr.bf16.mxu0 0
    %1437 = vmatpush1.bf16.msra.mxu0 0
    %1438 = vmatprep.subr.bf16.mxu0 0
    %1439 = vmatpush1.bf16.msra.mxu0 0
    %1440 = vmatprep.subr.bf16.mxu0 0
    %1441 = vmatpush1.bf16.msra.mxu0 0
    %1442 = vmatprep.subr.bf16.mxu0 0
    %1443 = vmatpush1.bf16.msra.mxu0 0
    %1444 = vmatprep.subr.bf16.mxu0 0
    %1445 = vmatpush1.bf16.msra.mxu0 0
    %1446 = vmatprep.subr.bf16.mxu0 0
    %1447 = vmatpush1.bf16.msra.mxu0 0
    %1448 = vmatprep.subr.bf16.mxu0 0
    %1449 = vmatpush1.bf16.msra.mxu0 0
    %1450 = vmatprep.subr.bf16.mxu0 0
    %1451 = vmatpush1.bf16.msra.mxu0 0
    %1452 = vmatprep.subr.bf16.mxu0 0
    %1453 = vmatpush1.bf16.msra.mxu0 0
    %1454 = vmatprep.subr.bf16.mxu0 0
    %1455 = vmatpush1.bf16.msra.mxu0 0
    %1456 = vmatprep.subr.bf16.mxu0 0
    %1457 = vmatpush1.bf16.msra.mxu0 0
    %1458 = vmatprep.subr.bf16.mxu0 0
    %1459 = vmatpush1.bf16.msra.mxu0 0
    %1460 = vmatprep.subr.bf16.mxu0 0
    %1461 = vmatpush1.bf16.msra.mxu0 0
    %1462 = vmatprep.mubr.bf16.mxu0 0
    %1463 = vmatmul.mubr.bf16.gmra.mrb[0].mxu0 %v1425
    %v1464 = vpop.f32.mrb[0].mxu0
    %v1465 = vadd.f32 0.0, %v1464
    %v1466 = vpop.f32.mrb[0].mxu0
    %v1467 = vpop.f32.mrb[0].mxu0
    %v1468 = vpop.f32.mrb[0].mxu0
    %1469 = vdwg.mxu0
    %v1470 = vpack.c.bf16 %v1465, %v1419
    %s1471 = scalar_lea.vmem [#allocation7], 64
    %v1472 = vld [vmem:[%s1471] sm:$0xf]
    %v1473 = vld [vmem:[%s1471 + $0x4] sm:$0xf]
    %v1474 = vld [vmem:[%s1471 + $0x8] sm:$0xf]
    %v1475 = vld [vmem:[%s1471 + $0xc] sm:$0xf]
    %v1476 = vld [vmem:[%s1471 + $0x10] sm:$0xf]
    %v1477 = vld [vmem:[%s1471 + $0x14] sm:$0xf]
    %v1478 = vld [vmem:[%s1471 + $0x18] sm:$0xf]
    %v1479 = vld [vmem:[%s1471 + $0x1c] sm:$0xf]
    %v1480 = vld [vmem:[%s1471 + $0x20] sm:$0xf]
    %v1481 = vld [vmem:[%s1471 + $0x24] sm:$0xf]
    %v1482 = vld [vmem:[%s1471 + $0x28] sm:$0xf]
    %v1483 = vld [vmem:[%s1471 + $0x2c] sm:$0xf]
    %v1484 = vld [vmem:[%s1471 + $0x30] sm:$0xf]
    %v1485 = vld [vmem:[%s1471 + $0x34] sm:$0xf]
    %v1486 = vld [vmem:[%s1471 + $0x38] sm:$0xf]
    %v1487 = vld [vmem:[%s1471 + $0x3c] sm:$0xf]
    %v1488 = vlaneseq
    %v1489 = vshrl.u32 %v1488, 7
    %v1490 = vsub.s32 0, %v1489
    %v1491 = vrot.slane %v1004, %v1490
    %v1508 = vunpack.c.l.b16 %v1472
    %v1509 = vunpack.c.l.b16 %v1473
    %v1510 = vunpack.c.l.b16 %v1474
    %v1511 = vunpack.c.l.b16 %v1475
    %v1512 = vunpack.c.l.b16 %v1476
    %v1513 = vunpack.c.l.b16 %v1477
    %v1514 = vunpack.c.l.b16 %v1478
    %v1515 = vunpack.c.l.b16 %v1479
    %v1516 = vunpack.c.l.b16 %v1480
    %v1517 = vunpack.c.l.b16 %v1481
    %v1518 = vunpack.c.l.b16 %v1482
    %v1519 = vunpack.c.l.b16 %v1483
    %v1520 = vunpack.c.l.b16 %v1484
    %v1521 = vunpack.c.l.b16 %v1485
    %v1522 = vunpack.c.l.b16 %v1486
    %v1523 = vunpack.c.l.b16 %v1487
    %v1524 = vpack.c.b16 %v1509, %v1508
    %v1525 = vpack.c.b16 %v1511, %v1510
    %v1526 = vpack.c.b16 %v1513, %v1512
    %v1527 = vpack.c.b16 %v1515, %v1514
    %v1528 = vpack.c.b16 %v1517, %v1516
    %v1529 = vpack.c.b16 %v1519, %v1518
    %v1530 = vpack.c.b16 %v1521, %v1520
    %v1531 = vpack.c.b16 %v1523, %v1522
    %1540 = vmatprep.subr.bf16.mxu0 0
    %1541 = vmatpush1.bf16.msra.mxu0 %v1524
    %1542 = vmatprep.subr.bf16.mxu0 0
    %1543 = vmatpush1.bf16.msra.mxu0 %v1525
    %1544 = vmatprep.subr.bf16.mxu0 0
    %1545 = vmatpush1.bf16.msra.mxu0 %v1526
    %1546 = vmatprep.subr.bf16.mxu0 0
    %1547 = vmatpush1.bf16.msra.mxu0 %v1527
    %1548 = vmatprep.subr.bf16.mxu0 0
    %1549 = vmatpush1.bf16.msra.mxu0 %v1528
    %1550 = vmatprep.subr.bf16.mxu0 0
    %1551 = vmatpush1.bf16.msra.mxu0 %v1529
    %1552 = vmatprep.subr.bf16.mxu0 0
    %1553 = vmatpush1.bf16.msra.mxu0 %v1530
    %1554 = vmatprep.subr.bf16.mxu0 0
    %1555 = vmatpush1.bf16.msra.mxu0 %v1531
    %1556 = vmatprep.subr.bf16.mxu0 0
    %1557 = vmatpush1.bf16.msra.mxu0 0
    %1558 = vmatprep.subr.bf16.mxu0 0
    %1559 = vmatpush1.bf16.msra.mxu0 0
    %1560 = vmatprep.subr.bf16.mxu0 0
    %1561 = vmatpush1.bf16.msra.mxu0 0
    %1562 = vmatprep.subr.bf16.mxu0 0
    %1563 = vmatpush1.bf16.msra.mxu0 0
    %1564 = vmatprep.subr.bf16.mxu0 0
    %1565 = vmatpush1.bf16.msra.mxu0 0
    %1566 = vmatprep.subr.bf16.mxu0 0
    %1567 = vmatpush1.bf16.msra.mxu0 0
    %1568 = vmatprep.subr.bf16.mxu0 0
    %1569 = vmatpush1.bf16.msra.mxu0 0
    %1570 = vmatprep.subr.bf16.mxu0 0
    %1571 = vmatpush1.bf16.msra.mxu0 0
    %1572 = vmatprep.mubr.bf16.mxu0 0
    %1573 = vmatmul.mubr.bf16.gmra.mrb[0].mxu0 %v1470
    %v1574 = vpop.f32.mrb[0].mxu0
    %v1575 = vadd.f32 %v1491, %v1574
    %v1576 = vpop.f32.mrb[0].mxu0
    %v1577 = vpop.f32.mrb[0].mxu0
    %v1578 = vadd.f32 %v1491, %v1577
    %v1579 = vpop.f32.mrb[0].mxu0
    %1580 = vdwg.mxu0
    %v1581 = vadd.f32 %v1000, %v1575
    %v1582 = vadd.f32 %v1001, %v1578
    %1583 = vadd.xlane.f32.xlu0 %v1581
    %v1584 = vpop.xlane.xlu0 %1583
    %1585 = vadd.xlane.f32.xlu0 %v1582
    %v1586 = vpop.xlane.xlu0 %1585
    %v1587 = vmul.f32 %v1584, 0.03125
    %v1588 = vmul.f32 %v1586, 0.03125
    %v1589 = vmul.f32 %v1581, %v1581
    %v1590 = vmul.f32 %v1582, %v1582
    %1591 = vadd.xlane.f32.xlu0 %v1589
    %v1592 = vpop.xlane.xlu0 %1591
    %1593 = vadd.xlane.f32.xlu0 %v1590
    %v1594 = vpop.xlane.xlu0 %1593
    %v1595 = vmul.f32 %v1592, 0.03125
    %v1596 = vmul.f32 %v1594, 0.03125
    %v1597 = vmul.f32 %v1587, %v1587
    %v1598 = vmul.f32 %v1588, %v1588
    %v1599 = vsub.f32 %v1595, %v1597
    %v1600 = vsub.f32 %v1596, %v1598
    %v1601 = vsub.f32 %v1581, %v1587
    %v1602 = vsub.f32 %v1582, %v1588
    %v1603 = vadd.f32 %v1599, 1e-05
    %v1604 = vadd.f32 %v1600, 1e-05
    %v1605 = vrsqrt.pop %v1603
    %v1606 = vrsqrt.pop %v1604
    %v1607 = vmul.f32 %v1601, %v1605
    %v1608 = vmul.f32 %v1602, %v1606
    %v1609 = vlaneseq
    %v1610 = vshrl.u32 %v1609, 7
    %v1611 = vsub.s32 1, %v1610
    %v1612 = vrot.slane %v1004, %v1611
    %v1613 = vmul.f32 %v1607, %v1612
    %v1614 = vmul.f32 %v1608, %v1612
    %v1615 = vlaneseq
    %v1616 = vshrl.u32 %v1615, 7
    %v1617 = vsub.s32 2, %v1616
    %v1618 = vrot.slane %v1004, %v1617
    %v1619 = vadd.f32 %v1613, %v1618
    %v1620 = vadd.f32 %v1614, %v1618
    %v1621 = vpack.c.bf16 %v1620, %v1619
    %s1622 = scalar_lea.vmem [#allocation8], 64
    %v1623 = vld [vmem:[%s1622] sm:$0xf]
    %v1624 = vld [vmem:[%s1622 + $0x4] sm:$0xf]
    %v1625 = vld [vmem:[%s1622 + $0x8] sm:$0xf]
    %v1626 = vld [vmem:[%s1622 + $0xc] sm:$0xf]
    %v1627 = vld [vmem:[%s1622 + $0x10] sm:$0xf]
    %v1628 = vld [vmem:[%s1622 + $0x14] sm:$0xf]
    %v1629 = vld [vmem:[%s1622 + $0x18] sm:$0xf]
    %v1630 = vld [vmem:[%s1622 + $0x1c] sm:$0xf]
    %v1631 = vld [vmem:[%s1622 + $0x20] sm:$0xf]
    %v1632 = vld [vmem:[%s1622 + $0x24] sm:$0xf]
    %v1633 = vld [vmem:[%s1622 + $0x28] sm:$0xf]
    %v1634 = vld [vmem:[%s1622 + $0x2c] sm:$0xf]
    %v1635 = vld [vmem:[%s1622 + $0x30] sm:$0xf]
    %v1636 = vld [vmem:[%s1622 + $0x34] sm:$0xf]
    %v1637 = vld [vmem:[%s1622 + $0x38] sm:$0xf]
    %v1638 = vld [vmem:[%s1622 + $0x3c] sm:$0xf]
    %v1640 = vlaneseq
    %v1641 = vshrl.u32 %v1640, 7
    %v1642 = vsub.s32 0, %v1641
    %v1643 = vrot.slane %v1006, %v1642
    %v1661 = vunpack.c.l.b16 %v1623
    %v1662 = vunpack.c.l.b16 %v1624
    %v1663 = vunpack.c.l.b16 %v1625
    %v1664 = vunpack.c.l.b16 %v1626
    %v1665 = vunpack.c.l.b16 %v1627
    %v1666 = vunpack.c.l.b16 %v1628
    %v1667 = vunpack.c.l.b16 %v1629
    %v1668 = vunpack.c.l.b16 %v1630
    %v1669 = vunpack.c.l.b16 %v1631
    %v1670 = vunpack.c.l.b16 %v1632
    %v1671 = vunpack.c.l.b16 %v1633
    %v1672 = vunpack.c.l.b16 %v1634
    %v1673 = vunpack.c.l.b16 %v1635
    %v1674 = vunpack.c.l.b16 %v1636
    %v1675 = vunpack.c.l.b16 %v1637
    %v1676 = vunpack.c.l.b16 %v1638
    %v1677 = vpack.c.b16 %v1662, %v1661
    %v1678 = vpack.c.b16 %v1664, %v1663
    %v1679 = vpack.c.b16 %v1666, %v1665
    %v1680 = vpack.c.b16 %v1668, %v1667
    %v1681 = vpack.c.b16 %v1670, %v1669
    %v1682 = vpack.c.b16 %v1672, %v1671
    %v1683 = vpack.c.b16 %v1674, %v1673
    %v1684 = vpack.c.b16 %v1676, %v1675
    %1693 = vmatprep.subr.bf16.mxu0 0
    %1694 = vmatpush1.bf16.msra.mxu0 %v1677
    %1695 = vmatprep.subr.bf16.mxu0 0
    %1696 = vmatpush1.bf16.msra.mxu0 %v1678
    %1697 = vmatprep.subr.bf16.mxu0 0
    %1698 = vmatpush1.bf16.msra.mxu0 %v1679
    %1699 = vmatprep.subr.bf16.mxu0 0
    %1700 = vmatpush1.bf16.msra.mxu0 %v1680
    %1701 = vmatprep.subr.bf16.mxu0 0
    %1702 = vmatpush1.bf16.msra.mxu0 %v1681
    %1703 = vmatprep.subr.bf16.mxu0 0
    %1704 = vmatpush1.bf16.msra.mxu0 %v1682
    %1705 = vmatprep.subr.bf16.mxu0 0
    %1706 = vmatpush1.bf16.msra.mxu0 %v1683
    %1707 = vmatprep.subr.bf16.mxu0 0
    %1708 = vmatpush1.bf16.msra.mxu0 %v1684
    %1709 = vmatprep.subr.bf16.mxu0 0
    %1710 = vmatpush1.bf16.msra.mxu0 0
    %1711 = vmatprep.subr.bf16.mxu0 0
    %1712 = vmatpush1.bf16.msra.mxu0 0
    %1713 = vmatprep.subr.bf16.mxu0 0
    %1714 = vmatpush1.bf16.msra.mxu0 0
    %1715 = vmatprep.subr.bf16.mxu0 0
    %1716 = vmatpush1.bf16.msra.mxu0 0
    %1717 = vmatprep.subr.bf16.mxu0 0
    %1718 = vmatpush1.bf16.msra.mxu0 0
    %1719 = vmatprep.subr.bf16.mxu0 0
    %1720 = vmatpush1.bf16.msra.mxu0 0
    %1721 = vmatprep.subr.bf16.mxu0 0
    %1722 = vmatpush1.bf16.msra.mxu0 0
    %1723 = vmatprep.subr.bf16.mxu0 0
    %1724 = vmatpush1.bf16.msra.mxu0 0
    %1725 = vmatprep.mubr.bf16.mxu0 0
    %1726 = vmatmul.mubr.bf16.gmra.mrb[0].mxu0 %v1621
    %v1727 = vpop.f32.mrb[0].mxu0
    %v1728 = vadd.f32 %v1643, %v1727
    %v1729 = vpop.f32.mrb[0].mxu0
    %v1730 = vpop.f32.mrb[0].mxu0
    %v1731 = vadd.f32 %v1643, %v1730
    %v1732 = vpop.f32.mrb[0].mxu0
    %1733 = vdwg.mxu0
    %v1734 = vmax.f32 %v1728, 0.0
    %v1735 = vmax.f32 %v1731, 0.0
    %v1736 = vpack.c.bf16 %v1735, %v1734
    %s1737 = scalar_lea.vmem [#allocation10], 64
    %v1738 = vld [vmem:[%s1737] sm:$0xf]
    %v1739 = vld [vmem:[%s1737 + $0x4] sm:$0xf]
    %v1740 = vld [vmem:[%s1737 + $0x8] sm:$0xf]
    %v1741 = vld [vmem:[%s1737 + $0xc] sm:$0xf]
    %v1742 = vld [vmem:[%s1737 + $0x10] sm:$0xf]
    %v1743 = vld [vmem:[%s1737 + $0x14] sm:$0xf]
    %v1744 = vld [vmem:[%s1737 + $0x18] sm:$0xf]
    %v1745 = vld [vmem:[%s1737 + $0x1c] sm:$0xf]
    %v1746 = vld [vmem:[%s1737 + $0x20] sm:$0xf]
    %v1747 = vld [vmem:[%s1737 + $0x24] sm:$0xf]
    %v1748 = vld [vmem:[%s1737 + $0x28] sm:$0xf]
    %v1749 = vld [vmem:[%s1737 + $0x2c] sm:$0xf]
    %v1750 = vld [vmem:[%s1737 + $0x30] sm:$0xf]
    %v1751 = vld [vmem:[%s1737 + $0x34] sm:$0xf]
    %v1752 = vld [vmem:[%s1737 + $0x38] sm:$0xf]
    %v1753 = vld [vmem:[%s1737 + $0x3c] sm:$0xf]
    %v1754 = vlaneseq
    %v1755 = vshrl.u32 %v1754, 7
    %v1756 = vsub.s32 3, %v1755
    %v1757 = vrot.slane %v1004, %v1756
    %v1774 = vunpack.c.l.b16 %v1738
    %v1775 = vunpack.c.l.b16 %v1739
    %v1776 = vunpack.c.l.b16 %v1740
    %v1777 = vunpack.c.l.b16 %v1741
    %v1778 = vunpack.c.l.b16 %v1742
    %v1779 = vunpack.c.l.b16 %v1743
    %v1780 = vunpack.c.l.b16 %v1744
    %v1781 = vunpack.c.l.b16 %v1745
    %v1782 = vunpack.c.l.b16 %v1746
    %v1783 = vunpack.c.l.b16 %v1747
    %v1784 = vunpack.c.l.b16 %v1748
    %v1785 = vunpack.c.l.b16 %v1749
    %v1786 = vunpack.c.l.b16 %v1750
    %v1787 = vunpack.c.l.b16 %v1751
    %v1788 = vunpack.c.l.b16 %v1752
    %v1789 = vunpack.c.l.b16 %v1753
    %v1790 = vpack.c.b16 %v1775, %v1774
    %v1791 = vpack.c.b16 %v1777, %v1776
    %v1792 = vpack.c.b16 %v1779, %v1778
    %v1793 = vpack.c.b16 %v1781, %v1780
    %v1794 = vpack.c.b16 %v1783, %v1782
    %v1795 = vpack.c.b16 %v1785, %v1784
    %v1796 = vpack.c.b16 %v1787, %v1786
    %v1797 = vpack.c.b16 %v1789, %v1788
    %1806 = vmatprep.subr.bf16.mxu0 0
    %1807 = vmatpush1.bf16.msra.mxu0 %v1790
    %1808 = vmatprep.subr.bf16.mxu0 0
    %1809 = vmatpush1.bf16.msra.mxu0 %v1791
    %1810 = vmatprep.subr.bf16.mxu0 0
    %1811 = vmatpush1.bf16.msra.mxu0 %v1792
    %1812 = vmatprep.subr.bf16.mxu0 0
    %1813 = vmatpush1.bf16.msra.mxu0 %v1793
    %1814 = vmatprep.subr.bf16.mxu0 0
    %1815 = vmatpush1.bf16.msra.mxu0 %v1794
    %1816 = vmatprep.subr.bf16.mxu0 0
    %1817 = vmatpush1.bf16.msra.mxu0 %v1795
    %1818 = vmatprep.subr.bf16.mxu0 0
    %1819 = vmatpush1.bf16.msra.mxu0 %v1796
    %1820 = vmatprep.subr.bf16.mxu0 0
    %1821 = vmatpush1.bf16.msra.mxu0 %v1797
    %1822 = vmatprep.subr.bf16.mxu0 0
    %1823 = vmatpush1.bf16.msra.mxu0 0
    %1824 = vmatprep.subr.bf16.mxu0 0
    %1825 = vmatpush1.bf16.msra.mxu0 0
    %1826 = vmatprep.subr.bf16.mxu0 0
    %1827 = vmatpush1.bf16.msra.mxu0 0
    %1828 = vmatprep.subr.bf16.mxu0 0
    %1829 = vmatpush1.bf16.msra.mxu0 0
    %1830 = vmatprep.subr.bf16.mxu0 0
    %1831 = vmatpush1.bf16.msra.mxu0 0
    %1832 = vmatprep.subr.bf16.mxu0 0
    %1833 = vmatpush1.bf16.msra.mxu0 0
    %1834 = vmatprep.subr.bf16.mxu0 0
    %1835 = vmatpush1.bf16.msra.mxu0 0
    %1836 = vmatprep.subr.bf16.mxu0 0
    %1837 = vmatpush1.bf16.msra.mxu0 0
    %1838 = vmatprep.mubr.bf16.mxu0 0
    %1839 = vmatmul.mubr.bf16.gmra.mrb[0].mxu0 %v1736
    %v1840 = vpop.f32.mrb[0].mxu0
    %v1841 = vadd.f32 %v1757, %v1840
    %v1842 = vpop.f32.mrb[0].mxu0
    %v1843 = vpop.f32.mrb[0].mxu0
    %v1844 = vadd.f32 %v1757, %v1843
    %v1845 = vpop.f32.mrb[0].mxu0
    %1846 = vdwg.mxu0
    %v1847 = vadd.f32 %v1619, %v1841
    %v1848 = vadd.f32 %v1620, %v1844
    %1849 = vadd.xlane.f32.xlu0 %v1847
    %v1850 = vpop.xlane.xlu0 %1849
    %1851 = vadd.xlane.f32.xlu0 %v1848
    %v1852 = vpop.xlane.xlu0 %1851
    %v1853 = vmul.f32 %v1850, 0.03125
    %v1854 = vmul.f32 %v1852, 0.03125
    %v1855 = vmul.f32 %v1847, %v1847
    %v1856 = vmul.f32 %v1848, %v1848
    %1857 = vadd.xlane.f32.xlu0 %v1855
    %v1858 = vpop.xlane.xlu0 %1857
    %1859 = vadd.xlane.f32.xlu0 %v1856
    %v1860 = vpop.xlane.xlu0 %1859
    %v1861 = vmul.f32 %v1858, 0.03125
    %v1862 = vmul.f32 %v1860, 0.03125
    %v1863 = vmul.f32 %v1853, %v1853
    %v1864 = vmul.f32 %v1854, %v1854
    %v1865 = vsub.f32 %v1861, %v1863
    %v1866 = vsub.f32 %v1862, %v1864
    %v1867 = vsub.f32 %v1847, %v1853
    %v1868 = vsub.f32 %v1848, %v1854
    %v1869 = vadd.f32 %v1865, 1e-05
    %v1870 = vadd.f32 %v1866, 1e-05
    %v1871 = vrsqrt.pop %v1869
    %v1872 = vrsqrt.pop %v1870
    %v1873 = vmul.f32 %v1867, %v1871
    %v1874 = vmul.f32 %v1868, %v1872
    %v1875 = vlaneseq
    %v1876 = vshrl.u32 %v1875, 7
    %v1877 = vsub.s32 4, %v1876
    %v1878 = vrot.slane %v1004, %v1877
    %v1879 = vmul.f32 %v1873, %v1878
    %v1880 = vmul.f32 %v1874, %v1878
    %v1881 = vlaneseq
    %v1882 = vshrl.u32 %v1881, 7
    %v1883 = vsub.s32 5, %v1882
    %v1884 = vrot.slane %v1004, %v1883
    %v1885 = vadd.f32 %v1879, %v1884
    %v1886 = vadd.f32 %v1880, %v1884
    %v1887 = vld [vmem:[%s7] sm:$0x1]
    %v1888 = vld [vmem:[%s7 + $0x1] sm:$0x1]
    %v1889 = vld [vmem:[%s9] sm:$0x1]
    %1890 = vadd.xlane.f32.xlu0 %v1885
    %v1891 = vpop.xlane.xlu0 %1890
    %1892 = vadd.xlane.f32.xlu0 %v1886
    %v1893 = vpop.xlane.xlu0 %1892
    %v1894 = vmul.f32 %v1891, 0.03125
    %v1895 = vmul.f32 %v1893, 0.03125
    %v1896 = vmul.f32 %v1885, %v1885
    %v1897 = vmul.f32 %v1886, %v1886
    %1898 = vadd.xlane.f32.xlu0 %v1896
    %v1899 = vpop.xlane.xlu0 %1898
    %1900 = vadd.xlane.f32.xlu0 %v1897
    %v1901 = vpop.xlane.xlu0 %1900
    %v1902 = vmul.f32 %v1899, 0.03125
    %v1903 = vmul.f32 %v1901, 0.03125
    %v1904 = vmul.f32 %v1894, %v1894
    %v1905 = vmul.f32 %v1895, %v1895
    %v1906 = vsub.f32 %v1902, %v1904
    %v1907 = vsub.f32 %v1903, %v1905
    %v1908 = vsub.f32 %v1885, %v1894
    %v1909 = vsub.f32 %v1886, %v1895
    %v1910 = vadd.f32 %v1906, 1e-05
    %v1911 = vadd.f32 %v1907, 1e-05
    %v1912 = vrsqrt.pop %v1910
    %v1913 = vrsqrt.pop %v1911
    %v1914 = vmul.f32 %v1908, %v1912
    %v1915 = vmul.f32 %v1909, %v1913
    %v1916 = vlaneseq
    %v1917 = vshrl.u32 %v1916, 7
    %v1918 = vsub.s32 0, %v1917
    %v1919 = vrot.slane %v1887, %v1918
    %v1920 = vmul.f32 %v1914, %v1919
    %v1921 = vmul.f32 %v1915, %v1919
    %v1922 = vlaneseq
    %v1923 = vshrl.u32 %v1922, 7
    %v1924 = vsub.s32 0, %v1923
    %v1925 = vrot.slane %v1888, %v1924
    %v1926 = vadd.f32 %v1920, %v1925
    %v1927 = vadd.f32 %v1921, %v1925
    %v1928 = vpack.c.bf16 %v1927, %v1926
    %v1929 = vld [vmem:[#allocation11] sm:$0xf]
    %v1930 = vld [vmem:[#allocation11 + $0x4] sm:$0xf]
    %v1931 = vld [vmem:[#allocation11 + $0x8] sm:$0xf]
    %v1932 = vld [vmem:[#allocation11 + $0xc] sm:$0xf]
    %v1933 = vld [vmem:[#allocation11 + $0x10] sm:$0xf]
    %v1934 = vld [vmem:[#allocation11 + $0x14] sm:$0xf]
    %v1935 = vld [vmem:[#allocation11 + $0x18] sm:$0xf]
    %v1936 = vld [vmem:[#allocation11 + $0x1c] sm:$0xf]
    %v1937 = vld [vmem:[#allocation11 + $0x20] sm:$0xf]
    %v1938 = vld [vmem:[#allocation11 + $0x24] sm:$0xf]
    %v1939 = vld [vmem:[#allocation11 + $0x28] sm:$0xf]
    %v1940 = vld [vmem:[#allocation11 + $0x2c] sm:$0xf]
    %v1941 = vld [vmem:[#allocation11 + $0x30] sm:$0xf]
    %v1942 = vld [vmem:[#allocation11 + $0x34] sm:$0xf]
    %v1943 = vld [vmem:[#allocation11 + $0x38] sm:$0xf]
    %v1944 = vld [vmem:[#allocation11 + $0x3c] sm:$0xf]
    %v1946 = vlaneseq
    %v1947 = vshrl.u32 %v1946, 7
    %v1948 = vsub.s32 0, %v1947
    %v1949 = vrot.slane %v1889, %v1948
    %v1967 = vunpack.c.l.b16 %v1929
    %v1968 = vunpack.c.l.b16 %v1930
    %v1969 = vunpack.c.l.b16 %v1931
    %v1970 = vunpack.c.l.b16 %v1932
    %v1971 = vunpack.c.l.b16 %v1933
    %v1972 = vunpack.c.l.b16 %v1934
    %v1973 = vunpack.c.l.b16 %v1935
    %v1974 = vunpack.c.l.b16 %v1936
    %v1975 = vunpack.c.l.b16 %v1937
    %v1976 = vunpack.c.l.b16 %v1938
    %v1977 = vunpack.c.l.b16 %v1939
    %v1978 = vunpack.c.l.b16 %v1940
    %v1979 = vunpack.c.l.b16 %v1941
    %v1980 = vunpack.c.l.b16 %v1942
    %v1981 = vunpack.c.l.b16 %v1943
    %v1982 = vunpack.c.l.b16 %v1944
    %v1983 = vpack.c.b16 %v1968, %v1967
    %v1984 = vpack.c.b16 %v1970, %v1969
    %v1985 = vpack.c.b16 %v1972, %v1971
    %v1986 = vpack.c.b16 %v1974, %v1973
    %v1987 = vpack.c.b16 %v1976, %v1975
    %v1988 = vpack.c.b16 %v1978, %v1977
    %v1989 = vpack.c.b16 %v1980, %v1979
    %v1990 = vpack.c.b16 %v1982, %v1981
    %1999 = vmatprep.subr.bf16.mxu0 0
    %2000 = vmatpush1.bf16.msra.mxu0 %v1983
    %2001 = vmatprep.subr.bf16.mxu0 0
    %2002 = vmatpush1.bf16.msra.mxu0 %v1984
    %2003 = vmatprep.subr.bf16.mxu0 0
    %2004 = vmatpush1.bf16.msra.mxu0 %v1985
    %2005 = vmatprep.subr.bf16.mxu0 0
    %2006 = vmatpush1.bf16.msra.mxu0 %v1986
    %2007 = vmatprep.subr.bf16.mxu0 0
    %2008 = vmatpush1.bf16.msra.mxu0 %v1987
    %2009 = vmatprep.subr.bf16.mxu0 0
    %2010 = vmatpush1.bf16.msra.mxu0 %v1988
    %2011 = vmatprep.subr.bf16.mxu0 0
    %2012 = vmatpush1.bf16.msra.mxu0 %v1989
    %2013 = vmatprep.subr.bf16.mxu0 0
    %2014 = vmatpush1.bf16.msra.mxu0 %v1990
    %2015 = vmatprep.subr.bf16.mxu0 0
    %2016 = vmatpush1.bf16.msra.mxu0 0
    %2017 = vmatprep.subr.bf16.mxu0 0
    %2018 = vmatpush1.bf16.msra.mxu0 0
    %2019 = vmatprep.subr.bf16.mxu0 0
    %2020 = vmatpush1.bf16.msra.mxu0 0
    %2021 = vmatprep.subr.bf16.mxu0 0
    %2022 = vmatpush1.bf16.msra.mxu0 0
    %2023 = vmatprep.subr.bf16.mxu0 0
    %2024 = vmatpush1.bf16.msra.mxu0 0
    %2025 = vmatprep.subr.bf16.mxu0 0
    %2026 = vmatpush1.bf16.msra.mxu0 0
    %2027 = vmatprep.subr.bf16.mxu0 0
    %2028 = vmatpush1.bf16.msra.mxu0 0
    %2029 = vmatprep.subr.bf16.mxu0 0
    %2030 = vmatpush1.bf16.msra.mxu0 0
    %2031 = vmatprep.mubr.bf16.mxu0 0
    %2032 = vmatmul.mubr.bf16.gmra.mrb[0].mxu0 %v1928
    %v2033 = vpop.f32.mrb[0].mxu0
    %v2034 = vadd.f32 %v1949, %v2033
    %v2035 = vpop.f32.mrb[0].mxu0
    %v2036 = vpop.f32.mrb[0].mxu0
    %v2037 = vadd.f32 %v1949, %v2036
    %v2038 = vpop.f32.mrb[0].mxu0
    %2039 = vdwg.mxu0
    %2040 = vst [vmem:[#allocation13] sm:$0xff] %v2034
    %2041 = vst [vmem:[#allocation13 + $0x8] sm:$0xff] %v2037
    // Predicated region
    $region66: #{tpu_custom_call.1} parent=1 // pred_check
      _
    $region67: #{tpu_custom_call.1} parent=1 // pred_check_branch
      %2043 = sbr.rel (0) target = $region69
    $region68: #{tpu_custom_call.1} parent=1 // pred_region
      %s2045 = ssub.s32 256, 256
      %2046 = vsyncadd [#allocation4], %s2045
      %s2047 = sshll.u32 [#allocation13], 4
      %s2048 = int_to_ptr.vmem [resolvable:$true] %s2047
      %2053 = dma.vmem_to_hbm [thread:$0]  %s2048, 256, %s10, [#allocation4], 128, 128, 8
    $region69: #{tpu_custom_call.1} parent=1 // pred_fallthru
      _
    // Predicated region
    $region70: #{tpu_custom_call.1} parent=1 // pred_check
      _
    $region71: #{tpu_custom_call.1} parent=1 // pred_check_branch
      %2055 = sbr.rel (0) target = $region73
    $region72: #{tpu_custom_call.1} parent=1 // pred_region
      %2056 = dma.done [#allocation4], 256
    $region73: #{tpu_custom_call.1} parent=1 // pred_fallthru
      _
    %2057 = vsyncpa [#allocation3], 1
    %2058 = vsyncpa [#allocation6], 1
    %2059 = vsyncpa [#allocation9], 1
    %2060 = vsyncpa [#allocation12], 1
    %2061 = vsyncpa [#allocation4], 1

</llo_original>
